<compile_context>
chip_gen: v5e
topology: v5e:2x2
jax: 0.10.0
libtpu: 0.0.40
codegen_flags: <defaults>
</compile_context>

<pallas_src>
import math

import jax
import jax.numpy as jnp
from jax.experimental import pallas as pl
from jax.experimental.pallas import tpu as pltpu

# ------------------------- scaled-down configuration -------------------------
BATCH = 2
SEQ_LEN = 8            # NUM_FRAMES = 15 in the original
D_MODEL = 256          # GPT2_EMBED_DIM = 768 in the original
NUM_HEADS = 2          # 8 in the original
HEAD_DIM = D_MODEL // NUM_HEADS     # 128 -> lane-dense per-head tensors
FF_HIDDEN = 512        # FF_DIM * 2 = 4096 in the original
NUM_LAYERS = 2         # NUM_ENCODER_LAYERS = 6 in the original
LN_EPS = 1e-5
ATTN_SCALE = 1.0 / math.sqrt(HEAD_DIM)

NUM_STEPS = NUM_LAYERS + 1          # encoder layers + trailing self_attn/norm
ROW_TILES = 2                       # leading "parallel" grid axis (v7x 2nd TC)
B_PER_TILE = BATCH // ROW_TILES     # row tiles must align with batch boundaries
M_TILE = B_PER_TILE * SEQ_LEN
VEC_W = ((max(3 * D_MODEL, FF_HIDDEN, D_MODEL) + 127) // 128) * 128  # 768

# Row layout of the packed per-layer vector tile (8, VEC_W):
_ROW_B_IN, _ROW_B_OUT, _ROW_LN1_G, _ROW_LN1_B = 0, 1, 2, 3
_ROW_B1, _ROW_B2, _ROW_LN2_G, _ROW_LN2_B = 4, 5, 6, 7


# ------------------------------ in-kernel helpers -----------------------------
def _gelu_tanh(x):
    # tanh-approx GELU; tanh runs on the EUP slot (vs the erf polynomial's VALU
    # ops over the largest activation tensor).  ~1e-3 numerics shift vs erf GELU.
    c = math.sqrt(2.0 / math.pi)
    return 0.5 * x * (1.0 + jnp.tanh(c * (x + 0.044715 * x * x * x)))


def _layernorm(y, g, b):
    mu = jnp.mean(y, axis=-1, keepdims=True)
    var = jnp.mean(jnp.square(y - mu), axis=-1, keepdims=True)
    return (y - mu) * jax.lax.rsqrt(var + LN_EPS) * g + b


# --------------------------------- the kernel ---------------------------------
def _encoder_stack_kernel(x_ref, pos_ref,
                          w_in_ref, w_out_ref, w1_ref, w2_ref, vec_ref,
                          o_ref):
    step = pl.program_id(1)                 # layer index (innermost, "arbitrary")
    last_step = pl.num_programs(1) - 1

    # Layer 0 of each row tile: seed the VMEM-resident residual stream with
    # x + pos_encoding (self.dropout(x) is identity in eval mode).
    @pl.when(step == 0)
    def _():
        o_ref[...] = x_ref[...] + pos_ref[...]

    x = o_ref[...]                          # (M_TILE, D) f32 residual stream

    # Packed per-layer vectors: one (8, VEC_W) tile -> single DMA per step.
    b_in = vec_ref[_ROW_B_IN:_ROW_B_IN + 1, 0:3 * D_MODEL]
    b_out = vec_ref[_ROW_B_OUT:_ROW_B_OUT + 1, 0:D_MODEL]
    ln1_g = vec_ref[_ROW_LN1_G:_ROW_LN1_G + 1, 0:D_MODEL]
    ln1_b = vec_ref[_ROW_LN1_B:_ROW_LN1_B + 1, 0:D_MODEL]

    # ------------------- multi-head self-attention (fused QKV) ----------------
    qkv = jnp.dot(x.astype(jnp.bfloat16), w_in_ref[...],
                  preferred_element_type=jnp.float32) + b_in   # (M_TILE, 3D) f32
    q_all = qkv[:, 0:D_MODEL]
    k_all = qkv[:, D_MODEL:2 * D_MODEL]
    v_all = qkv[:, 2 * D_MODEL:3 * D_MODEL]

    # Static per-head loop with 128-lane-aligned slices.  Each head's output is
    # immediately projected through its slice of W_out and accumulated, so there
    # is no lane-concatenate and no list of live head outputs.
    acc = None
    for h in range(NUM_HEADS):
        lo, hi = h * HEAD_DIM, (h + 1) * HEAD_DIM
        q = q_all[:, lo:hi].reshape(B_PER_TILE, SEQ_LEN, HEAD_DIM).astype(jnp.bfloat16)
        k = k_all[:, lo:hi].reshape(B_PER_TILE, SEQ_LEN, HEAD_DIM).astype(jnp.bfloat16)
        v = v_all[:, lo:hi].reshape(B_PER_TILE, SEQ_LEN, HEAD_DIM).astype(jnp.bfloat16)
        s = jnp.einsum('bqd,bkd->bqk', q, k,
                       preferred_element_type=jnp.float32) * ATTN_SCALE
        s = s - jnp.max(s, axis=-1, keepdims=True)
        e = jnp.exp(s)
        p = e * pl.reciprocal(jnp.sum(e, axis=-1, keepdims=True), approx=True)
        o = jnp.einsum('bqk,bkd->bqd', p.astype(jnp.bfloat16), v,
                       preferred_element_type=jnp.float32)      # (Bt, S, HD)
        ph = jnp.dot(o.reshape(M_TILE, HEAD_DIM).astype(jnp.bfloat16),
                     w_out_ref[lo:hi, :],                       # 128-aligned rows
                     preferred_element_type=jnp.float32)        # (M_TILE, D)
        acc = ph if acc is None else acc + ph
    proj = acc + b_out

    y = _layernorm(x + proj, ln1_g, ln1_b)      # post-norm (norm_first=False)

    # Encoder layers (steps 0..L-1): feed-forward + second add & LayerNorm.
    @pl.when(step < last_step)
    def _():
        b1 = vec_ref[_ROW_B1:_ROW_B1 + 1, 0:FF_HIDDEN]
        b2 = vec_ref[_ROW_B2:_ROW_B2 + 1, 0:D_MODEL]
        ln2_g = vec_ref[_ROW_LN2_G:_ROW_LN2_G + 1, 0:D_MODEL]
        ln2_b = vec_ref[_ROW_LN2_B:_ROW_LN2_B + 1, 0:D_MODEL]
        h1 = jnp.dot(y.astype(jnp.bfloat16), w1_ref[...],
                     preferred_element_type=jnp.float32) + b1
        h1 = _gelu_tanh(h1)
        ff = jnp.dot(h1.astype(jnp.bfloat16), w2_ref[...],
                     preferred_element_type=jnp.float32) + b2
        o_ref[...] = _layernorm(y + ff, ln2_g, ln2_b)

    # Final step: the module's trailing self_attn + LayerNorm only.
    @pl.when(step == last_step)
    def _():
        o_ref[...] = y


# --------------------------------- wrapper -------------------------------------
def _pack_layer_vectors(params):
    """Pack the 8 small per-layer vectors into one (NUM_STEPS, 8, VEC_W) f32
    tensor (FFN/LN2 rows of the final step are zero and unused)."""
    sources = [
        params['attn_b_in'], params['attn_b_out'],
        params['ln1_g'], params['ln1_b'],
        params['ff_b1'], params['ff_b2'],
        params['ln2_g'], params['ln2_b'],
    ]
    rows = []
    for v in sources:
        r = jnp.zeros((NUM_STEPS, VEC_W), jnp.float32)
        r = r.at[:v.shape[0], :v.shape[-1]].set(v[:, 0, :].astype(jnp.float32))
        rows.append(r)
    return jnp.stack(rows, axis=1)                      # (NUM_STEPS, 8, VEC_W)


def transformer_encoder_forward(x, params):
    B, S, D = x.shape
    assert (B, S, D) == (BATCH, SEQ_LEN, D_MODEL)
    M = B * S

    x2d = x.reshape(M, D).astype(jnp.float32)
    pos2d = jnp.broadcast_to(params['pos_enc'], (B, S, D)).reshape(M, D)
    vec = _pack_layer_vectors(params)

    # NOTE: out_spec index map must depend only on the row-tile index i (never on
    # l) and l must stay the innermost axis -> residual stream stays VMEM-resident
    # across layers of a tile.
    act_spec = pl.BlockSpec((M_TILE, D), lambda i, l: (i, 0))

    def stacked_spec(trailing, clamp=False):
        last = NUM_LAYERS - 1
        if clamp:   # FFN weights: unused on the final step; reuse last block (no re-DMA)
            index_map = lambda i, l: (jnp.minimum(l, last), 0, 0)
        else:
            index_map = lambda i, l: (l, 0, 0)
        return pl.BlockSpec((None,) + trailing, index_map)

    out = pl.pallas_call(
        _encoder_stack_kernel,
        out_shape=jax.ShapeDtypeStruct((M, D), jnp.float32),
        grid=(ROW_TILES, NUM_STEPS),
        in_specs=[
            act_spec,                                   # x (flattened rows)
            act_spec,                                   # positional encoding
            stacked_spec((D, 3 * D)),                   # attn in-proj W   (bf16)
            stacked_spec((D, D)),                       # attn out-proj W  (bf16)
            stacked_spec((D, FF_HIDDEN), clamp=True),   # FFN W1           (bf16)
            stacked_spec((FF_HIDDEN, D), clamp=True),   # FFN W2           (bf16)
            stacked_spec((8, VEC_W)),                   # packed biases/LN vectors
        ],
        out_specs=act_spec,
        compiler_params=pltpu.CompilerParams(
            dimension_semantics=("parallel", "arbitrary"),
            vmem_limit_bytes=48 * 1024 * 1024),
    )(x2d, pos2d,
      params['attn_w_in'], params['attn_w_out'],
      params['ff_w1'], params['ff_w2'],
      vec)
    return out.reshape(B, S, D)


# --------------------------- parameters / pos-encoding ---------------------------
def make_pos_encoding(seq_len, d_model):
    pos = jnp.arange(seq_len, dtype=jnp.float32)[:, None]
    i = jnp.arange(d_model)
    # PyTorch: 2 * arange(d) // 2 / d  evaluates left-to-right  ==  arange(d) / d
    exponent = ((2 * i) // 2).astype(jnp.float32) / d_model
    angles = pos / jnp.power(10000.0, exponent)[None, :]
    pe = jnp.where((i % 2 == 0)[None, :], jnp.sin(angles), jnp.cos(angles))
    return pe[None].astype(jnp.float32)        # (1, S, D)


def init_params(key):
    keys = jax.random.split(key, 64)
    it = iter(keys)

    def w(shape, scale=0.02):
        return scale * jax.random.normal(next(it), shape, dtype=jnp.float32)

    n_attn = NUM_LAYERS + 1     # NUM_LAYERS encoder-layer attns + the final self_attn
    return dict(
        pos_enc=make_pos_encoding(SEQ_LEN, D_MODEL),
        # attention (stacked over layers; entry NUM_LAYERS == final self_attn)
        attn_w_in=w((n_attn, D_MODEL, 3 * D_MODEL)).astype(jnp.bfloat16),
        attn_b_in=w((n_attn, 1, 3 * D_MODEL)),
        attn_w_out=w((n_attn, D_MODEL, D_MODEL)).astype(jnp.bfloat16),
        attn_b_out=w((n_attn, 1, D_MODEL)),
        # LN after attention (entry NUM_LAYERS == the module's final self.norm)
        ln1_g=1.0 + 0.1 * jax.random.normal(next(it), (n_attn, 1, D_MODEL), dtype=jnp.float32),
        ln1_b=w((n_attn, 1, D_MODEL), 0.1),
        # feed-forward + LN2 (encoder layers only)
        ff_w1=w((NUM_LAYERS, D_MODEL, FF_HIDDEN)).astype(jnp.bfloat16),
        ff_b1=w((NUM_LAYERS, 1, FF_HIDDEN)),
        ff_w2=w((NUM_LAYERS, FF_HIDDEN, D_MODEL)).astype(jnp.bfloat16),
        ff_b2=w((NUM_LAYERS, 1, D_MODEL)),
        ln2_g=1.0 + 0.1 * jax.random.normal(next(it), (NUM_LAYERS, 1, D_MODEL), dtype=jnp.float32),
        ln2_b=w((NUM_LAYERS, 1, D_MODEL), 0.1),
    )


# ------------------------------- pure-JAX reference -------------------------------
def _ref_layernorm(y, g, b):
    mu = y.mean(axis=-1, keepdims=True)
    var = ((y - mu) ** 2).mean(axis=-1, keepdims=True)
    return (y - mu) / jnp.sqrt(var + LN_EPS) * g + b


def _ref_mha(x, w_in, b_in, w_out, b_out):
    B, S, D = x.shape
    hp = jax.lax.Precision.HIGHEST
    qkv = jnp.einsum('bsd,de->bse', x, w_in, precision=hp) + b_in
    q, k, v = jnp.split(qkv, 3, axis=-1)

    def heads(t):
        return t.reshape(B, S, NUM_HEADS, HEAD_DIM).transpose(0, 2, 1, 3)

    q, k, v = heads(q), heads(k), heads(v)
    s = jnp.einsum('bhqd,bhkd->bhqk', q, k, precision=hp) * ATTN_SCALE
    p = jax.nn.softmax(s, axis=-1)
    o = jnp.einsum('bhqk,bhkd->bhqd', p, v, precision=hp)
    o = o.transpose(0, 2, 1, 3).reshape(B, S, D)
    return jnp.einsum('bsd,de->bse', o, w_out, precision=hp) + b_out


def _ref_forward(x, params):
    hp = jax.lax.Precision.HIGHEST
    f32 = lambda a: a.astype(jnp.float32)
    h = x + params['pos_enc']
    for l in range(NUM_LAYERS + 1):
        sa = _ref_mha(h, f32(params['attn_w_in'][l]), params['attn_b_in'][l],
                      f32(params['attn_w_out'][l]), params['attn_b_out'][l])
        h = _ref_layernorm(h + sa, params['ln1_g'][l], params['ln1_b'][l])
        if l < NUM_LAYERS:
            z = jnp.einsum('bsd,df->bsf', h, f32(params['ff_w1'][l]),
                           precision=hp) + params['ff_b1'][l]
            z = jax.nn.gelu(z, approximate=False)
            ff = jnp.einsum('bsf,fd->bsd', z, f32(params['ff_w2'][l]),
                            precision=hp) + params['ff_b2'][l]
            h = _ref_layernorm(h + ff, params['ln2_g'][l], params['ln2_b'][l])
    return h


# -------------------------------------- main --------------------------------------
if __name__ == "__main__":
    key = jax.random.PRNGKey(0)
    k_params, k_x = jax.random.split(key)
    params = init_params(k_params)
    x = jax.random.normal(k_x, (BATCH, SEQ_LEN, D_MODEL), dtype=jnp.float32)

    fwd = jax.jit(transformer_encoder_forward)
    out = jax.block_until_ready(fwd(x, params))

    assert out.shape == (BATCH, SEQ_LEN, D_MODEL), out.shape
    assert bool(jnp.all(jnp.isfinite(out)))

    # Reference in f32 with the same (bf16-rounded) weights; kernel differs by
    # bf16 matmul inputs (incl. Q/K/V and softmax probs), approx reciprocal in
    # the softmax, and tanh-approx GELU -> loose mixed-precision tolerance.
    ref = _ref_forward(x, params)
    max_err = float(jnp.max(jnp.abs(out - ref)))
    assert bool(jnp.allclose(out, ref, atol=4e-2, rtol=4e-2)), max_err

    print("KERNEL_OK")
</pallas_src>

<mosaic_0001>
module attributes {stable_mosaic.version = 11 : i64} {
  func.func @_encoder_stack_kernel(%arg0: i32, %arg1: i32, %arg2: memref<8x256xf32, #tpu.memory_space<vmem>>, %arg3: memref<8x256xf32, #tpu.memory_space<vmem>>, %arg4: memref<1x256x768xbf16, #tpu.memory_space<vmem>>, %arg5: memref<1x256x256xbf16, #tpu.memory_space<vmem>>, %arg6: memref<1x256x512xbf16, #tpu.memory_space<vmem>>, %arg7: memref<1x512x256xbf16, #tpu.memory_space<vmem>>, %arg8: memref<1x8x768xf32, #tpu.memory_space<vmem>>, %arg9: memref<8x256xf32, #tpu.memory_space<vmem>>) attributes {dimension_semantics = [#tpu.dimension_semantics<parallel>, #tpu.dimension_semantics<arbitrary>], iteration_bounds = array<i64: 2, 3>, scalar_prefetch = 0 : i64, scratch_operands = 0 : i64, tpu.core_type = #tpu.core_type<tc>, window_params = [{transform_indices = @transform_0, window_bounds = array<i64: 8, 256>}, {transform_indices = @transform_1, window_bounds = array<i64: 8, 256>}, {transform_indices = @transform_2, window_bounds = array<i64: 1, 256, 768>}, {transform_indices = @transform_3, window_bounds = array<i64: 1, 256, 256>}, {transform_indices = @transform_4, window_bounds = array<i64: 1, 256, 512>}, {transform_indices = @transform_5, window_bounds = array<i64: 1, 512, 256>}, {transform_indices = @transform_6, window_bounds = array<i64: 1, 8, 768>}, {transform_indices = @transform_7, window_bounds = array<i64: 8, 256>}]} {
    %c0_i32 = arith.constant 0 : i32
    %0 = arith.cmpi eq, %arg1, %c0_i32 : i32
    %1 = arith.extui %0 : i1 to i32
    %c0_i32_0 = arith.constant 0 : i32
    %2 = arith.cmpi ne, %1, %c0_i32_0 : i32
    scf.if %2 {
      %c0_39 = arith.constant 0 : index
      %c0_40 = arith.constant 0 : index
      %111 = vector.load %arg2[%c0_39, %c0_40] : memref<8x256xf32, #tpu.memory_space<vmem>>, vector<8x256xf32>
      %c0_41 = arith.constant 0 : index
      %c0_42 = arith.constant 0 : index
      %112 = vector.load %arg3[%c0_41, %c0_42] : memref<8x256xf32, #tpu.memory_space<vmem>>, vector<8x256xf32>
      %113 = arith.addf %111, %112 : vector<8x256xf32>
      %c0_43 = arith.constant 0 : index
      %c0_44 = arith.constant 0 : index
      %114 = vector.load %arg9[%c0_43, %c0_44] : memref<8x256xf32, #tpu.memory_space<vmem>>, vector<8x256xf32>
      tpu.vector_store %arg9[%c0_43, %c0_44], %113 {strides = array<i32>} : memref<8x256xf32, #tpu.memory_space<vmem>>, vector<8x256xf32>,
    } else {
    }
    %c0 = arith.constant 0 : index
    %c0_1 = arith.constant 0 : index
    %3 = vector.load %arg9[%c0, %c0_1] : memref<8x256xf32, #tpu.memory_space<vmem>>, vector<8x256xf32>
    %c0_2 = arith.constant 0 : index
    %c0_3 = arith.constant 0 : index
    %c0_4 = arith.constant 0 : index
    %4 = vector.load %arg8[%c0_2, %c0_3, %c0_4] : memref<1x8x768xf32, #tpu.memory_space<vmem>>, vector<1x1x768xf32>
    %5 = vector.shape_cast %4 : vector<1x1x768xf32> to vector<1x768xf32>
    %c0_5 = arith.constant 0 : index
    %c1 = arith.constant 1 : index
    %c0_6 = arith.constant 0 : index
    %6 = vector.load %arg8[%c0_5, %c1, %c0_6] : memref<1x8x768xf32, #tpu.memory_space<vmem>>, vector<1x1x256xf32>
    %7 = vector.shape_cast %6 : vector<1x1x256xf32> to vector<1x256xf32>
    %c0_7 = arith.constant 0 : index
    %c2 = arith.constant 2 : index
    %c0_8 = arith.constant 0 : index
    %8 = vector.load %arg8[%c0_7, %c2, %c0_8] : memref<1x8x768xf32, #tpu.memory_space<vmem>>, vector<1x1x256xf32>
    %9 = vector.shape_cast %8 : vector<1x1x256xf32> to vector<1x256xf32>
    %c0_9 = arith.constant 0 : index
    %c3 = arith.constant 3 : index
    %c0_10 = arith.constant 0 : index
    %10 = vector.load %arg8[%c0_9, %c3, %c0_10] : memref<1x8x768xf32, #tpu.memory_space<vmem>>, vector<1x1x256xf32>
    %11 = vector.shape_cast %10 : vector<1x1x256xf32> to vector<1x256xf32>
    %12 = arith.truncf %3 : vector<8x256xf32> to vector<8x256xbf16>
    %c0_11 = arith.constant 0 : index
    %c0_12 = arith.constant 0 : index
    %c0_13 = arith.constant 0 : index
    %13 = vector.load %arg4[%c0_11, %c0_12, %c0_13] : memref<1x256x768xbf16, #tpu.memory_space<vmem>>, vector<1x256x768xbf16>
    %14 = vector.shape_cast %13 : vector<1x256x768xbf16> to vector<256x768xbf16>
    %cst = arith.constant dense<0.000000e+00> : vector<8x768xf32>
    %15 = tpu.matmul %12, %14, %cst {dimension_numbers = #tpu.dot_dimension_numbers<[1], [0], [0], [1], [0, 0, 1, 1], [], []>} : vector<8x256xbf16>, vector<256x768xbf16>, vector<8x768xf32> -> vector<8x768xf32>
    %16 = vector.broadcast %5 : vector<1x768xf32> to vector<8x768xf32>
    %17 = arith.addf %15, %16 : vector<8x768xf32>
    %18 = vector.extract_strided_slice %17 {offsets = [0, 0], sizes = [8, 256], strides = [1, 1]} : vector<8x768xf32> to vector<8x256xf32>
    %19 = vector.extract_strided_slice %17 {offsets = [0, 256], sizes = [8, 256], strides = [1, 1]} : vector<8x768xf32> to vector<8x256xf32>
    %20 = vector.extract_strided_slice %17 {offsets = [0, 512], sizes = [8, 256], strides = [1, 1]} : vector<8x768xf32> to vector<8x256xf32>
    %21 = vector.extract_strided_slice %18 {offsets = [0, 0], sizes = [8, 128], strides = [1, 1]} : vector<8x256xf32> to vector<8x128xf32>
    %22 = vector.shape_cast %21 : vector<8x128xf32> to vector<1x8x128xf32>
    %23 = arith.truncf %22 : vector<1x8x128xf32> to vector<1x8x128xbf16>
    %24 = vector.extract_strided_slice %19 {offsets = [0, 0], sizes = [8, 128], strides = [1, 1]} : vector<8x256xf32> to vector<8x128xf32>
    %25 = vector.shape_cast %24 : vector<8x128xf32> to vector<1x8x128xf32>
    %26 = arith.truncf %25 : vector<1x8x128xf32> to vector<1x8x128xbf16>
    %27 = vector.extract_strided_slice %20 {offsets = [0, 0], sizes = [8, 128], strides = [1, 1]} : vector<8x256xf32> to vector<8x128xf32>
    %28 = vector.shape_cast %27 : vector<8x128xf32> to vector<1x8x128xf32>
    %29 = arith.truncf %28 : vector<1x8x128xf32> to vector<1x8x128xbf16>
    "tpu.trace_start"() <{level = 10 : i32, message = "bqd,bkd->bqk"}> : () -> ()
    %cst_14 = arith.constant dense<0.000000e+00> : vector<1x8x8xf32>
    %30 = tpu.matmul %23, %26, %cst_14 {dimension_numbers = #tpu.dot_dimension_numbers<[2], [2], [1], [1], [0, 0, 0, 1, 1, 1], [0], [0]>} : vector<1x8x128xbf16>, vector<1x8x128xbf16>, vector<1x8x8xf32> -> vector<1x8x8xf32>
    "tpu.trace_stop"() : () -> ()
    %cst_15 = arith.constant 0.0883883461 : f32
    %31 = vector.broadcast %cst_15 : f32 to vector<1x8x8xf32>
    %32 = arith.mulf %30, %31 : vector<1x8x8xf32>
    %cst_16 = arith.constant dense<0xFF800000> : vector<1x8xf32>
    %33 = vector.multi_reduction <maximumf>, %32, %cst_16 [2] : vector<1x8x8xf32> to vector<1x8xf32>
    %34 = vector.shape_cast %33 : vector<1x8xf32> to vector<1x8x1xf32>
    %35 = vector.broadcast %34 : vector<1x8x1xf32> to vector<1x8x8xf32>
    %36 = arith.subf %32, %35 : vector<1x8x8xf32>
    %37 = math.exp %36 : vector<1x8x8xf32>
    %cst_17 = arith.constant dense<0.000000e+00> : vector<1x8xf32>
    %38 = vector.multi_reduction <add>, %37, %cst_17 [2] : vector<1x8x8xf32> to vector<1x8xf32>
    %39 = vector.shape_cast %38 : vector<1x8xf32> to vector<1x8x1xf32>
    %40 = tpu.reciprocal %39 {approx = true} : vector<1x8x1xf32> -> vector<1x8x1xf32>
    %41 = vector.broadcast %40 : vector<1x8x1xf32> to vector<1x8x8xf32>
    %42 = arith.mulf %37, %41 : vector<1x8x8xf32>
    %43 = arith.truncf %42 : vector<1x8x8xf32> to vector<1x8x8xbf16>
    "tpu.trace_start"() <{level = 10 : i32, message = "bqk,bkd->bqd"}> : () -> ()
    %cst_18 = arith.constant dense<0.000000e+00> : vector<1x8x128xf32>
    %44 = tpu.matmul %43, %29, %cst_18 {dimension_numbers = #tpu.dot_dimension_numbers<[2], [1], [1], [2], [0, 0, 0, 1, 1, 2], [0], [0]>} : vector<1x8x8xbf16>, vector<1x8x128xbf16>, vector<1x8x128xf32> -> vector<1x8x128xf32>
    "tpu.trace_stop"() : () -> ()
    %45 = vector.shape_cast %44 : vector<1x8x128xf32> to vector<8x128xf32>
    %46 = arith.truncf %45 : vector<8x128xf32> to vector<8x128xbf16>
    %c0_19 = arith.constant 0 : index
    %c0_20 = arith.constant 0 : index
    %c0_21 = arith.constant 0 : index
    %47 = vector.load %arg5[%c0_19, %c0_20, %c0_21] : memref<1x256x256xbf16, #tpu.memory_space<vmem>>, vector<1x128x256xbf16>
    %48 = vector.shape_cast %47 : vector<1x128x256xbf16> to vector<128x256xbf16>
    %cst_22 = arith.constant dense<0.000000e+00> : vector<8x256xf32>
    %49 = tpu.matmul %46, %48, %cst_22 {dimension_numbers = #tpu.dot_dimension_numbers<[1], [0], [0], [1], [0, 0, 1, 1], [], []>} : vector<8x128xbf16>, vector<128x256xbf16>, vector<8x256xf32> -> vector<8x256xf32>
    %50 = vector.extract_strided_slice %18 {offsets = [0, 128], sizes = [8, 128], strides = [1, 1]} : vector<8x256xf32> to vector<8x128xf32>
    %51 = vector.shape_cast %50 : vector<8x128xf32> to vector<1x8x128xf32>
    %52 = arith.truncf %51 : vector<1x8x128xf32> to vector<1x8x128xbf16>
    %53 = vector.extract_strided_slice %19 {offsets = [0, 128], sizes = [8, 128], strides = [1, 1]} : vector<8x256xf32> to vector<8x128xf32>
    %54 = vector.shape_cast %53 : vector<8x128xf32> to vector<1x8x128xf32>
    %55 = arith.truncf %54 : vector<1x8x128xf32> to vector<1x8x128xbf16>
    %56 = vector.extract_strided_slice %20 {offsets = [0, 128], sizes = [8, 128], strides = [1, 1]} : vector<8x256xf32> to vector<8x128xf32>
    %57 = vector.shape_cast %56 : vector<8x128xf32> to vector<1x8x128xf32>
    %58 = arith.truncf %57 : vector<1x8x128xf32> to vector<1x8x128xbf16>
    "tpu.trace_start"() <{level = 10 : i32, message = "bqd,bkd->bqk"}> : () -> ()
    %cst_23 = arith.constant dense<0.000000e+00> : vector<1x8x8xf32>
    %59 = tpu.matmul %52, %55, %cst_23 {dimension_numbers = #tpu.dot_dimension_numbers<[2], [2], [1], [1], [0, 0, 0, 1, 1, 1], [0], [0]>} : vector<1x8x128xbf16>, vector<1x8x128xbf16>, vector<1x8x8xf32> -> vector<1x8x8xf32>
    "tpu.trace_stop"() : () -> ()
    %cst_24 = arith.constant 0.0883883461 : f32
    %60 = vector.broadcast %cst_24 : f32 to vector<1x8x8xf32>
    %61 = arith.mulf %59, %60 : vector<1x8x8xf32>
    %cst_25 = arith.constant dense<0xFF800000> : vector<1x8xf32>
    %62 = vector.multi_reduction <maximumf>, %61, %cst_25 [2] : vector<1x8x8xf32> to vector<1x8xf32>
    %63 = vector.shape_cast %62 : vector<1x8xf32> to vector<1x8x1xf32>
    %64 = vector.broadcast %63 : vector<1x8x1xf32> to vector<1x8x8xf32>
    %65 = arith.subf %61, %64 : vector<1x8x8xf32>
    %66 = math.exp %65 : vector<1x8x8xf32>
    %cst_26 = arith.constant dense<0.000000e+00> : vector<1x8xf32>
    %67 = vector.multi_reduction <add>, %66, %cst_26 [2] : vector<1x8x8xf32> to vector<1x8xf32>
    %68 = vector.shape_cast %67 : vector<1x8xf32> to vector<1x8x1xf32>
    %69 = tpu.reciprocal %68 {approx = true} : vector<1x8x1xf32> -> vector<1x8x1xf32>
    %70 = vector.broadcast %69 : vector<1x8x1xf32> to vector<1x8x8xf32>
    %71 = arith.mulf %66, %70 : vector<1x8x8xf32>
    %72 = arith.truncf %71 : vector<1x8x8xf32> to vector<1x8x8xbf16>
    "tpu.trace_start"() <{level = 10 : i32, message = "bqk,bkd->bqd"}> : () -> ()
    %cst_27 = arith.constant dense<0.000000e+00> : vector<1x8x128xf32>
    %73 = tpu.matmul %72, %58, %cst_27 {dimension_numbers = #tpu.dot_dimension_numbers<[2], [1], [1], [2], [0, 0, 0, 1, 1, 2], [0], [0]>} : vector<1x8x8xbf16>, vector<1x8x128xbf16>, vector<1x8x128xf32> -> vector<1x8x128xf32>
    "tpu.trace_stop"() : () -> ()
    %74 = vector.shape_cast %73 : vector<1x8x128xf32> to vector<8x128xf32>
    %75 = arith.truncf %74 : vector<8x128xf32> to vector<8x128xbf16>
    %c0_28 = arith.constant 0 : index
    %c128 = arith.constant 128 : index
    %c0_29 = arith.constant 0 : index
    %76 = vector.load %arg5[%c0_28, %c128, %c0_29] : memref<1x256x256xbf16, #tpu.memory_space<vmem>>, vector<1x128x256xbf16>
    %77 = vector.shape_cast %76 : vector<1x128x256xbf16> to vector<128x256xbf16>
    %cst_30 = arith.constant dense<0.000000e+00> : vector<8x256xf32>
    %78 = tpu.matmul %75, %77, %cst_30 {dimension_numbers = #tpu.dot_dimension_numbers<[1], [0], [0], [1], [0, 0, 1, 1], [], []>} : vector<8x128xbf16>, vector<128x256xbf16>, vector<8x256xf32> -> vector<8x256xf32>
    %79 = arith.addf %49, %78 : vector<8x256xf32>
    %80 = vector.broadcast %7 : vector<1x256xf32> to vector<8x256xf32>
    %81 = arith.addf %79, %80 : vector<8x256xf32>
    %82 = arith.addf %3, %81 : vector<8x256xf32>
    %cst_31 = arith.constant dense<0.000000e+00> : vector<8xf32>
    %83 = vector.multi_reduction <add>, %82, %cst_31 [1] : vector<8x256xf32> to vector<8xf32>
    %84 = vector.shape_cast %83 : vector<8xf32> to vector<8x1xf32>
    %cst_32 = arith.constant 2.560000e+02 : f32
    %85 = vector.broadcast %cst_32 : f32 to vector<8x1xf32>
    %86 = arith.divf %84, %85 : vector<8x1xf32>
    %87 = vector.broadcast %86 : vector<8x1xf32> to vector<8x256xf32>
    %88 = arith.subf %82, %87 : vector<8x256xf32>
    %89 = arith.mulf %88, %88 : vector<8x256xf32>
    %cst_33 = arith.constant dense<0.000000e+00> : vector<8xf32>
    %90 = vector.multi_reduction <add>, %89, %cst_33 [1] : vector<8x256xf32> to vector<8xf32>
    %91 = vector.shape_cast %90 : vector<8xf32> to vector<8x1xf32>
    %cst_34 = arith.constant 2.560000e+02 : f32
    %92 = vector.broadcast %cst_34 : f32 to vector<8x1xf32>
    %93 = arith.divf %91, %92 : vector<8x1xf32>
    %94 = vector.broadcast %86 : vector<8x1xf32> to vector<8x256xf32>
    %95 = arith.subf %82, %94 : vector<8x256xf32>
    %cst_35 = arith.constant 9.99999974E-6 : f32
    %96 = vector.broadcast %cst_35 : f32 to vector<8x1xf32>
    %97 = arith.addf %93, %96 : vector<8x1xf32>
    %98 = math.rsqrt %97 : vector<8x1xf32>
    %99 = vector.broadcast %98 : vector<8x1xf32> to vector<8x256xf32>
    %100 = arith.mulf %95, %99 : vector<8x256xf32>
    %101 = vector.broadcast %9 : vector<1x256xf32> to vector<8x256xf32>
    %102 = arith.mulf %100, %101 : vector<8x256xf32>
    %103 = vector.broadcast %11 : vector<1x256xf32> to vector<8x256xf32>
    %104 = arith.addf %102, %103 : vector<8x256xf32>
    %c2_i32 = arith.constant 2 : i32
    %105 = arith.cmpi slt, %arg1, %c2_i32 : i32
    %106 = arith.extui %105 : i1 to i32
    %c0_i32_36 = arith.constant 0 : i32
    %107 = arith.cmpi ne, %106, %c0_i32_36 : i32
    scf.if %107 {
      %c0_39 = arith.constant 0 : index
      %c4 = arith.constant 4 : index
      %c0_40 = arith.constant 0 : index
      %111 = vector.load %arg8[%c0_39, %c4, %c0_40] : memref<1x8x768xf32, #tpu.memory_space<vmem>>, vector<1x1x512xf32>
      %112 = vector.shape_cast %111 : vector<1x1x512xf32> to vector<1x512xf32>
      %c0_41 = arith.constant 0 : index
      %c5 = arith.constant 5 : index
      %c0_42 = arith.constant 0 : index
      %113 = vector.load %arg8[%c0_41, %c5, %c0_42] : memref<1x8x768xf32, #tpu.memory_space<vmem>>, vector<1x1x256xf32>
      %114 = vector.shape_cast %113 : vector<1x1x256xf32> to vector<1x256xf32>
      %c0_43 = arith.constant 0 : index
      %c6 = arith.constant 6 : index
      %c0_44 = arith.constant 0 : index
      %115 = vector.load %arg8[%c0_43, %c6, %c0_44] : memref<1x8x768xf32, #tpu.memory_space<vmem>>, vector<1x1x256xf32>
      %116 = vector.shape_cast %115 : vector<1x1x256xf32> to vector<1x256xf32>
      %c0_45 = arith.constant 0 : index
      %c7 = arith.constant 7 : index
      %c0_46 = arith.constant 0 : index
      %117 = vector.load %arg8[%c0_45, %c7, %c0_46] : memref<1x8x768xf32, #tpu.memory_space<vmem>>, vector<1x1x256xf32>
      %118 = vector.shape_cast %117 : vector<1x1x256xf32> to vector<1x256xf32>
      %119 = arith.truncf %104 : vector<8x256xf32> to vector<8x256xbf16>
      %c0_47 = arith.constant 0 : index
      %c0_48 = arith.constant 0 : index
      %c0_49 = arith.constant 0 : index
      %120 = vector.load %arg6[%c0_47, %c0_48, %c0_49] : memref<1x256x512xbf16, #tpu.memory_space<vmem>>, vector<1x256x512xbf16>
      %121 = vector.shape_cast %120 : vector<1x256x512xbf16> to vector<256x512xbf16>
      %cst_50 = arith.constant dense<0.000000e+00> : vector<8x512xf32>
      %122 = tpu.matmul %119, %121, %cst_50 {dimension_numbers = #tpu.dot_dimension_numbers<[1], [0], [0], [1], [0, 0, 1, 1], [], []>} : vector<8x256xbf16>, vector<256x512xbf16>, vector<8x512xf32> -> vector<8x512xf32>
      %123 = vector.broadcast %112 : vector<1x512xf32> to vector<8x512xf32>
      %124 = arith.addf %122, %123 : vector<8x512xf32>
      %cst_51 = arith.constant 5.000000e-01 : f32
      %125 = vector.broadcast %cst_51 : f32 to vector<8x512xf32>
      %126 = arith.mulf %125, %124 : vector<8x512xf32>
      %cst_52 = arith.constant 4.471500e-02 : f32
      %127 = vector.broadcast %cst_52 : f32 to vector<8x512xf32>
      %128 = arith.mulf %127, %124 : vector<8x512xf32>
      %129 = arith.mulf %128, %124 : vector<8x512xf32>
      %130 = arith.mulf %129, %124 : vector<8x512xf32>
      %131 = arith.addf %124, %130 : vector<8x512xf32>
      %cst_53 = arith.constant 0.797884583 : f32
      %132 = vector.broadcast %cst_53 : f32 to vector<8x512xf32>
      %133 = arith.mulf %132, %131 : vector<8x512xf32>
      %134 = math.tanh %133 : vector<8x512xf32>
      %cst_54 = arith.constant 1.000000e+00 : f32
      %135 = vector.broadcast %cst_54 : f32 to vector<8x512xf32>
      %136 = arith.addf %135, %134 : vector<8x512xf32>
      %137 = arith.mulf %126, %136 : vector<8x512xf32>
      %138 = arith.truncf %137 : vector<8x512xf32> to vector<8x512xbf16>
      %c0_55 = arith.constant 0 : index
      %c0_56 = arith.constant 0 : index
      %c0_57 = arith.constant 0 : index
      %139 = vector.load %arg7[%c0_55, %c0_56, %c0_57] : memref<1x512x256xbf16, #tpu.memory_space<vmem>>, vector<1x512x256xbf16>
      %140 = vector.shape_cast %139 : vector<1x512x256xbf16> to vector<512x256xbf16>
      %cst_58 = arith.constant dense<0.000000e+00> : vector<8x256xf32>
      %141 = tpu.matmul %138, %140, %cst_58 {dimension_numbers = #tpu.dot_dimension_numbers<[1], [0], [0], [1], [0, 0, 1, 1], [], []>} : vector<8x512xbf16>, vector<512x256xbf16>, vector<8x256xf32> -> vector<8x256xf32>
      %142 = vector.broadcast %114 : vector<1x256xf32> to vector<8x256xf32>
      %143 = arith.addf %141, %142 : vector<8x256xf32>
      %144 = arith.addf %104, %143 : vector<8x256xf32>
      %cst_59 = arith.constant dense<0.000000e+00> : vector<8xf32>
      %145 = vector.multi_reduction <add>, %144, %cst_59 [1] : vector<8x256xf32> to vector<8xf32>
      %146 = vector.shape_cast %145 : vector<8xf32> to vector<8x1xf32>
      %cst_60 = arith.constant 2.560000e+02 : f32
      %147 = vector.broadcast %cst_60 : f32 to vector<8x1xf32>
      %148 = arith.divf %146, %147 : vector<8x1xf32>
      %149 = vector.broadcast %148 : vector<8x1xf32> to vector<8x256xf32>
      %150 = arith.subf %144, %149 : vector<8x256xf32>
      %151 = arith.mulf %150, %150 : vector<8x256xf32>
      %cst_61 = arith.constant dense<0.000000e+00> : vector<8xf32>
      %152 = vector.multi_reduction <add>, %151, %cst_61 [1] : vector<8x256xf32> to vector<8xf32>
      %153 = vector.shape_cast %152 : vector<8xf32> to vector<8x1xf32>
      %cst_62 = arith.constant 2.560000e+02 : f32
      %154 = vector.broadcast %cst_62 : f32 to vector<8x1xf32>
      %155 = arith.divf %153, %154 : vector<8x1xf32>
      %156 = vector.broadcast %148 : vector<8x1xf32> to vector<8x256xf32>
      %157 = arith.subf %144, %156 : vector<8x256xf32>
      %cst_63 = arith.constant 9.99999974E-6 : f32
      %158 = vector.broadcast %cst_63 : f32 to vector<8x1xf32>
      %159 = arith.addf %155, %158 : vector<8x1xf32>
      %160 = math.rsqrt %159 : vector<8x1xf32>
      %161 = vector.broadcast %160 : vector<8x1xf32> to vector<8x256xf32>
      %162 = arith.mulf %157, %161 : vector<8x256xf32>
      %163 = vector.broadcast %116 : vector<1x256xf32> to vector<8x256xf32>
      %164 = arith.mulf %162, %163 : vector<8x256xf32>
      %165 = vector.broadcast %118 : vector<1x256xf32> to vector<8x256xf32>
      %166 = arith.addf %164, %165 : vector<8x256xf32>
      %c0_64 = arith.constant 0 : index
      %c0_65 = arith.constant 0 : index
      %167 = vector.load %arg9[%c0_64, %c0_65] : memref<8x256xf32, #tpu.memory_space<vmem>>, vector<8x256xf32>
      tpu.vector_store %arg9[%c0_64, %c0_65], %166 {strides = array<i32>} : memref<8x256xf32, #tpu.memory_space<vmem>>, vector<8x256xf32>,
    } else {
    }
    %c2_i32_37 = arith.constant 2 : i32
    %108 = arith.cmpi eq, %arg1, %c2_i32_37 : i32
    %109 = arith.extui %108 : i1 to i32
    %c0_i32_38 = arith.constant 0 : i32
    %110 = arith.cmpi ne, %109, %c0_i32_38 : i32
    scf.if %110 {
      %c0_39 = arith.constant 0 : index
      %c0_40 = arith.constant 0 : index
      %111 = vector.load %arg9[%c0_39, %c0_40] : memref<8x256xf32, #tpu.memory_space<vmem>>, vector<8x256xf32>
      tpu.vector_store %arg9[%c0_39, %c0_40], %104 {strides = array<i32>} : memref<8x256xf32, #tpu.memory_space<vmem>>, vector<8x256xf32>,
    } else {
    }
    return
  }
  func.func @transform_0(%arg0: i32, %arg1: i32) -> (i32, i32) {
    %c0_i32 = arith.constant 0 : i32
    %c0_i32_0 = arith.constant 0 : i32
    return %arg0, %c0_i32 : i32, i32
  }
  func.func @transform_1(%arg0: i32, %arg1: i32) -> (i32, i32) {
    %c0_i32 = arith.constant 0 : i32
    %c0_i32_0 = arith.constant 0 : i32
    return %arg0, %c0_i32 : i32, i32
  }
  func.func @transform_2(%arg0: i32, %arg1: i32) -> (i32, i32, i32) {
    %c0_i32 = arith.constant 0 : i32
    %c0_i32_0 = arith.constant 0 : i32
    %c0_i32_1 = arith.constant 0 : i32
    return %arg1, %c0_i32, %c0_i32_0 : i32, i32, i32
  }
  func.func @transform_3(%arg0: i32, %arg1: i32) -> (i32, i32, i32) {
    %c0_i32 = arith.constant 0 : i32
    %c0_i32_0 = arith.constant 0 : i32
    %c0_i32_1 = arith.constant 0 : i32
    return %arg1, %c0_i32, %c0_i32_0 : i32, i32, i32
  }
  func.func @transform_4(%arg0: i32, %arg1: i32) -> (i32, i32, i32) {
    %c1_i32 = arith.constant 1 : i32
    %0 = arith.minsi %arg1, %c1_i32 : i32
    %c0_i32 = arith.constant 0 : i32
    %c0_i32_0 = arith.constant 0 : i32
    %c0_i32_1 = arith.constant 0 : i32
    return %0, %c0_i32, %c0_i32_0 : i32, i32, i32
  }
  func.func @transform_5(%arg0: i32, %arg1: i32) -> (i32, i32, i32) {
    %c1_i32 = arith.constant 1 : i32
    %0 = arith.minsi %arg1, %c1_i32 : i32
    %c0_i32 = arith.constant 0 : i32
    %c0_i32_0 = arith.constant 0 : i32
    %c0_i32_1 = arith.constant 0 : i32
    return %0, %c0_i32, %c0_i32_0 : i32, i32, i32
  }
  func.func @transform_6(%arg0: i32, %arg1: i32) -> (i32, i32, i32) {
    %c0_i32 = arith.constant 0 : i32
    %c0_i32_0 = arith.constant 0 : i32
    %c0_i32_1 = arith.constant 0 : i32
    return %arg1, %c0_i32, %c0_i32_0 : i32, i32, i32
  }
  func.func @transform_7(%arg0: i32, %arg1: i32) -> (i32, i32) {
    %c0_i32 = arith.constant 0 : i32
    %c0_i32_0 = arith.constant 0 : i32
    return %arg0, %c0_i32 : i32, i32
  }
}

</mosaic_0001>

<llo_original>
// kernel: transformer_encoder_forward.1
$region0: #{transformer_encoder_forward.1}
  #allocation0 [shape = 'u32[]', space=smem, size = 0x4, offset = 0x4, fixed_abs, tag = 'smem constant byte address 0x4 - core index']
  #allocation1 [shape = 'u32[72,128]{1,0:T(1,128)}', space=vmem, size = 0x9000, scoped, tag = 'internal scratch']
  %s0 = inlined_call_operand.hbm [shape: f32[16,256], index: 0, kind: input, shape index: {}]
  %s1 = inlined_call_operand.vmem [shape: f32[16,256], index: 1, kind: input, shape index: {}]
  %s2 = inlined_call_operand.hbm [shape: bf16[3,256,768], index: 2, kind: input, shape index: {}]
  %s3 = inlined_call_operand.hbm [shape: bf16[3,256,256], index: 3, kind: input, shape index: {}]
  %s4 = inlined_call_operand.hbm [shape: bf16[2,256,512], index: 4, kind: input, shape index: {}]
  %s5 = inlined_call_operand.hbm [shape: bf16[2,512,256], index: 5, kind: input, shape index: {}]
  %s6 = inlined_call_operand.vmem [shape: f32[3,8,768], index: 6, kind: input, shape index: {}]
  %s7 = inlined_call_operand.hbm [shape: f32[16,256], index: 7, kind: output, shape index: {}]
  %s8 = sld [smem:[#allocation0]]
  $region93: #{transformer_encoder_forward.1} parent=0
    _
  %s10 = ssub.s32 1, %s8
  %s11 = scalar_select 0, %s10, %s8
  $region1: #{transformer_encoder_forward.1} parent=0
    #allocation2 [shape = 'u8[16384]{0}', space=vmem, size = 0x4000, scoped, tag = 'input window, operand 0']
    #allocation3 [shape = 's32[2]{0}', space=sflag, size = 0x8, scoped, tag = 'scoped memory for transformer_encoder_forward.1']
    #allocation4 [shape = 's32[2]{0}', space=sflag, size = 0x8, scoped, tag = 'scoped memory for transformer_encoder_forward.1']
    #allocation5 [shape = 'u8[786432]{0}', space=vmem, size = 0xc0000, scoped, tag = 'input window, operand 2']
    #allocation6 [shape = 's32[2]{0}', space=sflag, size = 0x8, scoped, tag = 'scoped memory for transformer_encoder_forward.1']
    #allocation7 [shape = 'u8[262144]{0}', space=vmem, size = 0x40000, scoped, tag = 'input window, operand 3']
    #allocation8 [shape = 'u8[524288]{0}', space=vmem, size = 0x80000, scoped, tag = 'input window, operand 4']
    #allocation9 [shape = 's32[2]{0}', space=sflag, size = 0x8, scoped, tag = 'scoped memory for transformer_encoder_forward.1']
    #allocation10 [shape = 'u8[524288]{0}', space=vmem, size = 0x80000, scoped, tag = 'input window, operand 5']
    #allocation11 [shape = 'u8[16384]{0}', space=vmem, size = 0x4000, scoped, tag = 'output window, operand 0']
    %12 = vsyncpa [#allocation3], 0
    %s13 = scalar_lea.sflag [#allocation3], 1
    %14 = vsyncpa %s13, 0
    %15 = vsyncpa [#allocation6], 0
    %s16 = scalar_lea.sflag [#allocation6], 1
    %17 = vsyncpa %s16, 0
    %18 = vsyncpa [#allocation9], 0
    %s19 = scalar_lea.sflag [#allocation9], 1
    %20 = vsyncpa %s19, 0
    %21 = vsyncpa [#allocation4], 0
    %s22 = scalar_lea.sflag [#allocation4], 1
    %23 = vsyncpa %s22, 0
    loop: start=0, step=1, limit=8
    $region2: #{transformer_encoder_forward.1} parent=1 // loop_pre_header
      _
    $region3: #{transformer_encoder_forward.1} parent=1 // loop_header
      %s25 = sphi 0, %s29
      %p26 = scmp.ge.s32.totalorder %s25, 8
      %s32 = sphi 0, %s44
      %s33 = sphi 0, %s40
      %s34 = sphi 0, %s32
      %s35 = sphi 0, %s33
      %s36 = sphi 0, %s34
      %s37 = sphi 0, %s35
      %s47 = sphi 0, %s49
      %s50 = sphi 0, %s47
      %s51 = sphi 0, %s50
      %s67 = sphi 0, %s51
      %s73 = sphi 0, %s75
      %s76 = sphi 0, %s73
      %s77 = sphi 0, %s76
      %s93 = sphi 0, %s77
      %s99 = sphi 0, %s101
      %s102 = sphi 0, %s99
      %s103 = sphi 0, %s102
      %s119 = sphi 0, %s103
      %s125 = sphi 0, %s127
      %s128 = sphi 0, %s125
      %s129 = sphi 0, %s128
      %s145 = sphi 0, %s129
      %s155 = sphi 0, %s157
      %s158 = sphi 0, %s155
      %s159 = sphi 0, %s158
      %s175 = sphi 0, %s159
      %s185 = sphi 0, %s187
      %s188 = sphi 0, %s185
      %s189 = sphi 0, %s188
      %s205 = sphi 0, %s189
      %s211 = sphi 0, %s213
      %s214 = sphi 0, %s211
      %s215 = sphi 0, %s214
      %s231 = sphi 0, %s215
      %s237 = sphi 0, %s239
      %s240 = sphi 0, %s237
      %s241 = sphi 0, %s240
      %s257 = sphi 0, %s241
    $region4: #{transformer_encoder_forward.1} parent=1 // loop_header_branch
      %28 = sbr.rel (%p26) target = $region8
    $region5: #{transformer_encoder_forward.1} parent=1 // loop_body
      %s30 = ssub.s32 %s25, 1
      %s31 = ssub.s32 %s25, 2
      %s38 = sadd.s32 1, %s33
      %p39 = scmp.ge.s32.totalorder %s38, 3
      %s40 = scalar_select %p39, 0, %s38
      %s41 = sadd.s32 1, %s32
      %s42 = scalar_select %p39, %s41, %s32
      %p43 = scmp.ge.s32.totalorder %s42, 2
      %s44 = scalar_select %p43, 0, %s42
      %s45 = ssub.s32 %s32, %s44
      %p46 = scmp.eq.s32.totalorder %s45, 0
      %s48 = sadd.s32 %s47, 1
      %s49 = scalar_select %p46, %s47, %s48
      %p52 = pneg %p46
      %p53 = scmp.eq.s32.totalorder %s25, 5
      %p54 = por %p52, %p53
      %p55 = scmp.ne.s32.totalorder %s47, %s50
      %p56 = scmp.eq.s32.totalorder %s25, 0
      %p57 = por %p55, %p56
      %p58 = scmp.ne.s32.totalorder %s47, %s50
      %p59 = scmp.eq.s32.totalorder %s30, 5
      %p60 = por %p58, %p59
      %p61 = scmp.ne.s32.totalorder %s50, %s51
      %p62 = scmp.eq.s32.totalorder %s30, 0
      %p63 = por %p61, %p62
      %p64 = scmp.ne.s32.totalorder %s50, %s51
      %p65 = scmp.eq.s32.totalorder %s31, 5
      %p66 = por %p64, %p65
      %p68 = scmp.ne.s32.totalorder %s51, %s67
      %p69 = scmp.eq.s32.totalorder %s31, 0
      %p70 = por %p68, %p69
      %s71 = ssub.s32 %s32, %s44
      %p72 = scmp.eq.s32.totalorder %s71, 0
      %s74 = sadd.s32 %s73, 1
      %s75 = scalar_select %p72, %s73, %s74
      %p78 = pneg %p72
      %p79 = scmp.eq.s32.totalorder %s25, 5
      %p80 = por %p78, %p79
      %p81 = scmp.ne.s32.totalorder %s73, %s76
      %p82 = scmp.eq.s32.totalorder %s25, 0
      %p83 = por %p81, %p82
      %p84 = scmp.ne.s32.totalorder %s73, %s76
      %p85 = scmp.eq.s32.totalorder %s30, 5
      %p86 = por %p84, %p85
      %p87 = scmp.ne.s32.totalorder %s76, %s77
      %p88 = scmp.eq.s32.totalorder %s30, 0
      %p89 = por %p87, %p88
      %p90 = scmp.ne.s32.totalorder %s76, %s77
      %p91 = scmp.eq.s32.totalorder %s31, 5
      %p92 = por %p90, %p91
      %p94 = scmp.ne.s32.totalorder %s77, %s93
      %p95 = scmp.eq.s32.totalorder %s31, 0
      %p96 = por %p94, %p95
      %s97 = ssub.s32 %s33, %s40
      %p98 = scmp.eq.s32.totalorder %s97, 0
      %s100 = sadd.s32 %s99, 1
      %s101 = scalar_select %p98, %s99, %s100
      %p104 = pneg %p98
      %p105 = scmp.eq.s32.totalorder %s25, 5
      %p106 = por %p104, %p105
      %p107 = scmp.ne.s32.totalorder %s99, %s102
      %p108 = scmp.eq.s32.totalorder %s25, 0
      %p109 = por %p107, %p108
      %p110 = scmp.ne.s32.totalorder %s99, %s102
      %p111 = scmp.eq.s32.totalorder %s30, 5
      %p112 = por %p110, %p111
      %p113 = scmp.ne.s32.totalorder %s102, %s103
      %p114 = scmp.eq.s32.totalorder %s30, 0
      %p115 = por %p113, %p114
      %p116 = scmp.ne.s32.totalorder %s102, %s103
      %p117 = scmp.eq.s32.totalorder %s31, 5
      %p118 = por %p116, %p117
      %p120 = scmp.ne.s32.totalorder %s103, %s119
      %p121 = scmp.eq.s32.totalorder %s31, 0
      %p122 = por %p120, %p121
      %s123 = ssub.s32 %s33, %s40
      %p124 = scmp.eq.s32.totalorder %s123, 0
      %s126 = sadd.s32 %s125, 1
      %s127 = scalar_select %p124, %s125, %s126
      %p130 = pneg %p124
      %p131 = scmp.eq.s32.totalorder %s25, 5
      %p132 = por %p130, %p131
      %p133 = scmp.ne.s32.totalorder %s125, %s128
      %p134 = scmp.eq.s32.totalorder %s25, 0
      %p135 = por %p133, %p134
      %p136 = scmp.ne.s32.totalorder %s125, %s128
      %p137 = scmp.eq.s32.totalorder %s30, 5
      %p138 = por %p136, %p137
      %p139 = scmp.ne.s32.totalorder %s128, %s129
      %p140 = scmp.eq.s32.totalorder %s30, 0
      %p141 = por %p139, %p140
      %p142 = scmp.ne.s32.totalorder %s128, %s129
      %p143 = scmp.eq.s32.totalorder %s31, 5
      %p144 = por %p142, %p143
      %p146 = scmp.ne.s32.totalorder %s129, %s145
      %p147 = scmp.eq.s32.totalorder %s31, 0
      %p148 = por %p146, %p147
      %p149 = scmp.lt.s32.totalorder %s33, 1
      %s150 = scalar_select %p149, %s33, 1
      %p151 = scmp.lt.s32.totalorder %s40, 1
      %s152 = scalar_select %p151, %s40, 1
      %s153 = ssub.s32 %s150, %s152
      %p154 = scmp.eq.s32.totalorder %s153, 0
      %s156 = sadd.s32 %s155, 1
      %s157 = scalar_select %p154, %s155, %s156
      %p160 = pneg %p154
      %p161 = scmp.eq.s32.totalorder %s25, 5
      %p162 = por %p160, %p161
      %p163 = scmp.ne.s32.totalorder %s155, %s158
      %p164 = scmp.eq.s32.totalorder %s25, 0
      %p165 = por %p163, %p164
      %p166 = scmp.ne.s32.totalorder %s155, %s158
      %p167 = scmp.eq.s32.totalorder %s30, 5
      %p168 = por %p166, %p167
      %p169 = scmp.ne.s32.totalorder %s158, %s159
      %p170 = scmp.eq.s32.totalorder %s30, 0
      %p171 = por %p169, %p170
      %p172 = scmp.ne.s32.totalorder %s158, %s159
      %p173 = scmp.eq.s32.totalorder %s31, 5
      %p174 = por %p172, %p173
      %p176 = scmp.ne.s32.totalorder %s159, %s175
      %p177 = scmp.eq.s32.totalorder %s31, 0
      %p178 = por %p176, %p177
      %p179 = scmp.lt.s32.totalorder %s33, 1
      %s180 = scalar_select %p179, %s33, 1
      %p181 = scmp.lt.s32.totalorder %s40, 1
      %s182 = scalar_select %p181, %s40, 1
      %s183 = ssub.s32 %s180, %s182
      %p184 = scmp.eq.s32.totalorder %s183, 0
      %s186 = sadd.s32 %s185, 1
      %s187 = scalar_select %p184, %s185, %s186
      %p190 = pneg %p184
      %p191 = scmp.eq.s32.totalorder %s25, 5
      %p192 = por %p190, %p191
      %p193 = scmp.ne.s32.totalorder %s185, %s188
      %p194 = scmp.eq.s32.totalorder %s25, 0
      %p195 = por %p193, %p194
      %p196 = scmp.ne.s32.totalorder %s185, %s188
      %p197 = scmp.eq.s32.totalorder %s30, 5
      %p198 = por %p196, %p197
      %p199 = scmp.ne.s32.totalorder %s188, %s189
      %p200 = scmp.eq.s32.totalorder %s30, 0
      %p201 = por %p199, %p200
      %p202 = scmp.ne.s32.totalorder %s188, %s189
      %p203 = scmp.eq.s32.totalorder %s31, 5
      %p204 = por %p202, %p203
      %p206 = scmp.ne.s32.totalorder %s189, %s205
      %p207 = scmp.eq.s32.totalorder %s31, 0
      %p208 = por %p206, %p207
      %s209 = ssub.s32 %s33, %s40
      %p210 = scmp.eq.s32.totalorder %s209, 0
      %s212 = sadd.s32 %s211, 1
      %s213 = scalar_select %p210, %s211, %s212
      %p216 = pneg %p210
      %p217 = scmp.eq.s32.totalorder %s25, 5
      %p218 = por %p216, %p217
      %p219 = scmp.ne.s32.totalorder %s211, %s214
      %p220 = scmp.eq.s32.totalorder %s25, 0
      %p221 = por %p219, %p220
      %p222 = scmp.ne.s32.totalorder %s211, %s214
      %p223 = scmp.eq.s32.totalorder %s30, 5
      %p224 = por %p222, %p223
      %p225 = scmp.ne.s32.totalorder %s214, %s215
      %p226 = scmp.eq.s32.totalorder %s30, 0
      %p227 = por %p225, %p226
      %p228 = scmp.ne.s32.totalorder %s214, %s215
      %p229 = scmp.eq.s32.totalorder %s31, 5
      %p230 = por %p228, %p229
      %p232 = scmp.ne.s32.totalorder %s215, %s231
      %p233 = scmp.eq.s32.totalorder %s31, 0
      %p234 = por %p232, %p233
      %s235 = ssub.s32 %s32, %s44
      %p236 = scmp.eq.s32.totalorder %s235, 0
      %s238 = sadd.s32 %s237, 1
      %s239 = scalar_select %p236, %s237, %s238
      %p242 = pneg %p236
      %p243 = scmp.eq.s32.totalorder %s25, 5
      %p244 = por %p242, %p243
      %p245 = scmp.ne.s32.totalorder %s237, %s240
      %p246 = scmp.eq.s32.totalorder %s25, 0
      %p247 = por %p245, %p246
      %p248 = scmp.ne.s32.totalorder %s237, %s240
      %p249 = scmp.eq.s32.totalorder %s30, 5
      %p250 = por %p248, %p249
      %p251 = scmp.ne.s32.totalorder %s240, %s241
      %p252 = scmp.eq.s32.totalorder %s30, 0
      %p253 = por %p251, %p252
      %p254 = scmp.ne.s32.totalorder %s240, %s241
      %p255 = scmp.eq.s32.totalorder %s31, 5
      %p256 = por %p254, %p255
      %p258 = scmp.ne.s32.totalorder %s241, %s257
      %p259 = scmp.eq.s32.totalorder %s31, 0
      %p260 = por %p258, %p259
      %p261 = scmp.le.s32.totalorder 1, %s25
      %p262 = scmp.lt.s32.totalorder %s25, 7
      %p263 = pnand %p261, %p262
      %p264 = pneg %p263
      // Predicated region
      $region9: #{transformer_encoder_forward.1} parent=5 // pred_check
        _
      $region10: #{transformer_encoder_forward.1} parent=5 // pred_check_branch
        %266 = sbr.rel (%p263) target = $region12
      $region11: #{transformer_encoder_forward.1} parent=5 // pred_region
        %s267 = ssub.s32 %s25, 1
      $region12: #{transformer_encoder_forward.1} parent=5 // pred_fallthru
        _
      %p268 = scmp.lt.s32.totalorder %s25, 6
      // Predicated region
      $region13: #{transformer_encoder_forward.1} parent=5 // pred_check
        %p269 = pneg %p268
      $region14: #{transformer_encoder_forward.1} parent=5 // pred_check_branch
        %271 = sbr.rel (%p269) target = $region16
      $region15: #{transformer_encoder_forward.1} parent=5 // pred_region
        // Predicated region
        $region17: #{transformer_encoder_forward.1} parent=15 // pred_check
          %p272 = pneg %p57
        $region18: #{transformer_encoder_forward.1} parent=15 // pred_check_branch
          %274 = sbr.rel (%p272) target = $region20
        $region19: #{transformer_encoder_forward.1} parent=15 // pred_region
          %s275 = sand.u32 %s47, 1
          %s276 = scalar_lea.sflag [#allocation3], %s275
          %s277 = sand.u32 %s47, 1
          %s278 = smul.addr %s277, 16
          %s279 = scalar_lea.vmem [#allocation2], %s278
          %281 = vsyncadd %s276, 0
          %s282 = smul.addr %s32, 2
          %s283 = smul.addr %s282, 8
          %s284 = scalar_lea.hbm %s0, %s283
          %s286 = sshll.u32 %s284, 4
          %s287 = int_to_ptr.hbm [resolvable:$true] %s286
          %s288 = sshll.u32 %s279, 4
          %s289 = int_to_ptr.vmem [resolvable:$true] %s288
          %291 = dma.hbm_to_vmem [thread:$0]  %s287, 256, %s289, %s276
        $region20: #{transformer_encoder_forward.1} parent=15 // pred_fallthru
          _
        // Predicated region
        $region21: #{transformer_encoder_forward.1} parent=15 // pred_check
          %p292 = pneg %p83
        $region22: #{transformer_encoder_forward.1} parent=15 // pred_check_branch
          %294 = sbr.rel (%p292) target = $region24
        $region23: #{transformer_encoder_forward.1} parent=15 // pred_region
          %p295 = scmp.lt.s32.totalorder %s32, 1
          %s296 = scalar_select %p295, %s32, 1
          %s297 = smul.addr %s296, 2
          %s298 = smul.addr %s297, 8
          %s299 = scalar_lea.vmem %s1, %s298
        $region24: #{transformer_encoder_forward.1} parent=15 // pred_fallthru
          _
        // Predicated region
        $region25: #{transformer_encoder_forward.1} parent=15 // pred_check
          %p300 = pneg %p109
        $region26: #{transformer_encoder_forward.1} parent=15 // pred_check_branch
          %302 = sbr.rel (%p300) target = $region28
        $region27: #{transformer_encoder_forward.1} parent=15 // pred_region
          %s303 = sand.u32 %s25, 1
          %s304 = scalar_lea.sflag [#allocation6], %s303
          %s305 = sand.u32 %s99, 1
          %s306 = smul.addr %s305, 768
          %s307 = scalar_lea.vmem [#allocation5], %s306
          %309 = vsyncadd %s304, 0
          %s310 = smul.addr %s33, 192
          %s311 = smul.addr %s310, 4
          %s312 = scalar_lea.hbm %s2, %s311
          %s313 = sshll.u32 %s312, 4
          %s314 = int_to_ptr.hbm [resolvable:$true] %s313
          %s315 = sshll.u32 %s307, 4
          %s316 = int_to_ptr.vmem [resolvable:$true] %s315
          %321 = dma.hbm_to_vmem [thread:$0]  %s314, 12288, %s316, %s304, 384, 384, 24
        $region28: #{transformer_encoder_forward.1} parent=15 // pred_fallthru
          _
        // Predicated region
        $region29: #{transformer_encoder_forward.1} parent=15 // pred_check
          %p322 = pneg %p135
        $region30: #{transformer_encoder_forward.1} parent=15 // pred_check_branch
          %324 = sbr.rel (%p322) target = $region32
        $region31: #{transformer_encoder_forward.1} parent=15 // pred_region
          %s325 = sand.u32 %s25, 1
          %s326 = scalar_lea.sflag [#allocation6], %s325
          %s327 = sand.u32 %s125, 1
          %s328 = smul.addr %s327, 256
          %s329 = scalar_lea.vmem [#allocation7], %s328
          %331 = vsyncadd %s326, 0
          %s332 = smul.addr %s33, 64
          %s333 = smul.addr %s332, 4
          %s334 = scalar_lea.hbm %s3, %s333
          %s335 = sshll.u32 %s334, 4
          %s336 = int_to_ptr.hbm [resolvable:$true] %s335
          %s337 = sshll.u32 %s329, 4
          %s338 = int_to_ptr.vmem [resolvable:$true] %s337
          %343 = dma.hbm_to_vmem [thread:$0]  %s336, 4096, %s338, %s326, 128, 128, 8
        $region32: #{transformer_encoder_forward.1} parent=15 // pred_fallthru
          _
        // Predicated region
        $region33: #{transformer_encoder_forward.1} parent=15 // pred_check
          %p344 = pneg %p165
        $region34: #{transformer_encoder_forward.1} parent=15 // pred_check_branch
          %346 = sbr.rel (%p344) target = $region36
        $region35: #{transformer_encoder_forward.1} parent=15 // pred_region
          %s347 = sand.u32 %s25, 1
          %s348 = scalar_lea.sflag [#allocation9], %s347
          %s349 = sand.u32 %s155, 1
          %s350 = smul.addr %s349, 512
          %s351 = scalar_lea.vmem [#allocation8], %s350
          %p352 = scmp.lt.s32.totalorder %s33, 1
          %s353 = scalar_select %p352, %s33, 1
          %355 = vsyncadd %s348, 0
          %s356 = smul.addr %s353, 128
          %s357 = smul.addr %s356, 4
          %s358 = scalar_lea.hbm %s4, %s357
          %s359 = sshll.u32 %s358, 4
          %s360 = int_to_ptr.hbm [resolvable:$true] %s359
          %s361 = sshll.u32 %s351, 4
          %s362 = int_to_ptr.vmem [resolvable:$true] %s361
          %367 = dma.hbm_to_vmem [thread:$0]  %s360, 8192, %s362, %s348, 256, 256, 16
        $region36: #{transformer_encoder_forward.1} parent=15 // pred_fallthru
          _
        // Predicated region
        $region37: #{transformer_encoder_forward.1} parent=15 // pred_check
          %p368 = pneg %p195
        $region38: #{transformer_encoder_forward.1} parent=15 // pred_check_branch
          %370 = sbr.rel (%p368) target = $region40
        $region39: #{transformer_encoder_forward.1} parent=15 // pred_region
          %s371 = sand.u32 %s25, 1
          %s372 = scalar_lea.sflag [#allocation9], %s371
          %s373 = sand.u32 %s185, 1
          %s374 = smul.addr %s373, 512
          %s375 = scalar_lea.vmem [#allocation10], %s374
          %p376 = scmp.lt.s32.totalorder %s33, 1
          %s377 = scalar_select %p376, %s33, 1
          %379 = vsyncadd %s372, 0
          %s380 = smul.addr %s377, 128
          %s381 = smul.addr %s380, 4
          %s382 = scalar_lea.hbm %s5, %s381
          %s383 = sshll.u32 %s382, 4
          %s384 = int_to_ptr.hbm [resolvable:$true] %s383
          %s385 = sshll.u32 %s375, 4
          %s386 = int_to_ptr.vmem [resolvable:$true] %s385
          %391 = dma.hbm_to_vmem [thread:$0]  %s384, 8192, %s386, %s372, 128, 128, 8
        $region40: #{transformer_encoder_forward.1} parent=15 // pred_fallthru
          _
        // Predicated region
        $region41: #{transformer_encoder_forward.1} parent=15 // pred_check
          %p392 = pneg %p221
        $region42: #{transformer_encoder_forward.1} parent=15 // pred_check_branch
          %394 = sbr.rel (%p392) target = $region44
        $region43: #{transformer_encoder_forward.1} parent=15 // pred_region
          %p395 = scmp.lt.s32.totalorder %s33, 2
          %s396 = scalar_select %p395, %s33, 2
          %s397 = smul.addr %s396, 6
          %s398 = smul.addr %s397, 8
          %s399 = scalar_lea.vmem %s6, %s398
        $region44: #{transformer_encoder_forward.1} parent=15 // pred_fallthru
          _
      $region16: #{transformer_encoder_forward.1} parent=5 // pred_fallthru
        _
      %p400 = scmp.le.s32.totalorder 1, %s25
      %p401 = scmp.lt.s32.totalorder %s25, 7
      %p402 = pnand %p400, %p401
      %p403 = pneg %p402
      // Predicated region
      $region45: #{transformer_encoder_forward.1} parent=5 // pred_check
        _
      $region46: #{transformer_encoder_forward.1} parent=5 // pred_check_branch
        %405 = sbr.rel (%p402) target = $region48
      $region47: #{transformer_encoder_forward.1} parent=5 // pred_region
        %s406 = ssub.s32 %s25, 1
        %s407 = sand.u32 %s50, 1
        %s408 = scalar_lea.sflag [#allocation3], %s407
        %s409 = sand.u32 %s50, 1
        %s410 = smul.addr %s409, 16
        %s411 = scalar_lea.vmem [#allocation2], %s410
        // Predicated region
        $region49: #{transformer_encoder_forward.1} parent=47 // pred_check
          %p412 = pneg %p63
        $region50: #{transformer_encoder_forward.1} parent=47 // pred_check_branch
          %414 = sbr.rel (%p412) target = $region52
        $region51: #{transformer_encoder_forward.1} parent=47 // pred_region
          %416 = dma.done %s408, 256
        $region52: #{transformer_encoder_forward.1} parent=47 // pred_fallthru
          _
        %s417 = sand.u32 %s30, 1
        %s418 = scalar_lea.sflag [#allocation6], %s417
        %s419 = sand.u32 %s102, 1
        %s420 = smul.addr %s419, 768
        %s421 = scalar_lea.vmem [#allocation5], %s420
        // Predicated region
        $region53: #{transformer_encoder_forward.1} parent=47 // pred_check
          %p422 = pneg %p115
        $region54: #{transformer_encoder_forward.1} parent=47 // pred_check_branch
          %424 = sbr.rel (%p422) target = $region56
        $region55: #{transformer_encoder_forward.1} parent=47 // pred_region
          %426 = dma.done %s418, 12288
        $region56: #{transformer_encoder_forward.1} parent=47 // pred_fallthru
          _
        %s427 = sand.u32 %s30, 1
        %s428 = scalar_lea.sflag [#allocation6], %s427
        %s429 = sand.u32 %s128, 1
        %s430 = smul.addr %s429, 256
        %s431 = scalar_lea.vmem [#allocation7], %s430
        // Predicated region
        $region57: #{transformer_encoder_forward.1} parent=47 // pred_check
          %p432 = pneg %p141
        $region58: #{transformer_encoder_forward.1} parent=47 // pred_check_branch
          %434 = sbr.rel (%p432) target = $region60
        $region59: #{transformer_encoder_forward.1} parent=47 // pred_region
          %436 = dma.done %s428, 4096
        $region60: #{transformer_encoder_forward.1} parent=47 // pred_fallthru
          _
        %s437 = sand.u32 %s30, 1
        %s438 = scalar_lea.sflag [#allocation9], %s437
        %s439 = sand.u32 %s158, 1
        %s440 = smul.addr %s439, 512
        %s441 = scalar_lea.vmem [#allocation8], %s440
        // Predicated region
        $region61: #{transformer_encoder_forward.1} parent=47 // pred_check
          %p442 = pneg %p171
        $region62: #{transformer_encoder_forward.1} parent=47 // pred_check_branch
          %444 = sbr.rel (%p442) target = $region64
        $region63: #{transformer_encoder_forward.1} parent=47 // pred_region
          %446 = dma.done %s438, 8192
        $region64: #{transformer_encoder_forward.1} parent=47 // pred_fallthru
          _
        %s447 = sand.u32 %s30, 1
        %s448 = scalar_lea.sflag [#allocation9], %s447
        %s449 = sand.u32 %s188, 1
        %s450 = smul.addr %s449, 512
        %s451 = scalar_lea.vmem [#allocation10], %s450
        // Predicated region
        $region65: #{transformer_encoder_forward.1} parent=47 // pred_check
          %p452 = pneg %p201
        $region66: #{transformer_encoder_forward.1} parent=47 // pred_check_branch
          %454 = sbr.rel (%p452) target = $region68
        $region67: #{transformer_encoder_forward.1} parent=47 // pred_region
          %456 = dma.done %s448, 8192
        $region68: #{transformer_encoder_forward.1} parent=47 // pred_fallthru
          _
        %s457 = sand.u32 %s50, 1
        %s458 = scalar_lea.sflag [#allocation3], %s457
        %s459 = sand.u32 %s50, 1
        %s460 = smul.addr %s459, 16
        %s461 = scalar_lea.vmem [#allocation2], %s460
        %p462 = pneg %p63
        %p463 = pneg %p60
        %p464 = scmp.lt.s32.totalorder %s34, 1
        %s465 = scalar_select %p464, %s34, 1
        %s466 = smul.addr %s465, 2
        %s467 = smul.addr %s466, 8
        %s468 = scalar_lea.vmem %s1, %s467
        %p469 = pneg %p89
        %p470 = pneg %p86
        %s471 = sand.u32 %s30, 1
        %s472 = scalar_lea.sflag [#allocation6], %s471
        %s473 = sand.u32 %s102, 1
        %s474 = smul.addr %s473, 768
        %s475 = scalar_lea.vmem [#allocation5], %s474
        %p476 = pneg %p115
        %p477 = pneg %p112
        %s478 = sand.u32 %s30, 1
        %s479 = scalar_lea.sflag [#allocation6], %s478
        %s480 = sand.u32 %s128, 1
        %s481 = smul.addr %s480, 256
        %s482 = scalar_lea.vmem [#allocation7], %s481
        %p483 = pneg %p141
        %p484 = pneg %p138
        %s485 = sand.u32 %s30, 1
        %s486 = scalar_lea.sflag [#allocation9], %s485
        %s487 = sand.u32 %s158, 1
        %s488 = smul.addr %s487, 512
        %s489 = scalar_lea.vmem [#allocation8], %s488
        %p490 = pneg %p171
        %p491 = pneg %p168
        %s492 = sand.u32 %s30, 1
        %s493 = scalar_lea.sflag [#allocation9], %s492
        %s494 = sand.u32 %s188, 1
        %s495 = smul.addr %s494, 512
        %s496 = scalar_lea.vmem [#allocation10], %s495
        %p497 = pneg %p201
        %p498 = pneg %p198
        %p499 = scmp.lt.s32.totalorder %s35, 2
        %s500 = scalar_select %p499, %s35, 2
        %s501 = smul.addr %s500, 6
        %s502 = smul.addr %s501, 8
        %s503 = scalar_lea.vmem %s6, %s502
        %p504 = pneg %p227
        %p505 = pneg %p224
        %p506 = pneg %p253
        %p507 = pneg %p250
        %s508 = sand.u32 %s240, 1
        %s509 = scalar_lea.sflag [#allocation4], %s508
        %s510 = sand.u32 %s240, 1
        %s511 = smul.addr %s510, 16
        %s512 = scalar_lea.vmem [#allocation11], %s511
        %p513 = scmp.lt.s32.totalorder %s34, 1
        %s514 = scalar_select %p513, %s34, 1
        %s515 = smul.addr %s514, 2
        %s516 = smul.addr %s515, 8
        %s517 = scalar_lea.vmem %s1, %s516
        %p518 = scmp.lt.s32.totalorder %s35, 1
        %s519 = scalar_select %p518, %s35, 1
        %p520 = scmp.lt.s32.totalorder %s35, 1
        %s521 = scalar_select %p520, %s35, 1
        %p522 = scmp.lt.s32.totalorder %s35, 2
        %s523 = scalar_select %p522, %s35, 2
        %s524 = smul.addr %s523, 6
        %s525 = smul.addr %s524, 8
        %s526 = scalar_lea.vmem %s6, %s525
        %p528 = scmp.eq.s32.totalorder %s35, 0
        // Predicated region
        $region69: #{transformer_encoder_forward.1} parent=47 // pred_check
          %p529 = pneg %p528
        $region70: #{transformer_encoder_forward.1} parent=47 // pred_check_branch
          %531 = sbr.rel (%p529) target = $region72
        $region71: #{transformer_encoder_forward.1} parent=47 // pred_region
          %v532 = vld [vmem:[%s411] sm:$0xff]
          %v533 = vld [vmem:[%s411 + $0x8] sm:$0xff]
          %v534 = vld [vmem:[%s517] sm:$0xff]
          %v535 = vld [vmem:[%s517 + $0x8] sm:$0xff]
          %v536 = vadd.f32 %v532, %v534
          %v537 = vadd.f32 %v533, %v535
          %538 = vst [vmem:[%s512] sm:$0xff] %v536
          %539 = vst [vmem:[%s512 + $0x8] sm:$0xff] %v537
        $region72: #{transformer_encoder_forward.1} parent=47 // pred_fallthru
          _
        %v540 = vld [vmem:[%s512] sm:$0xff]
        %v541 = vld [vmem:[%s512 + $0x8] sm:$0xff]
        %v542 = vld [vmem:[%s526] ss:$8 sm:$0xf]
        %v543 = vld [vmem:[%s526] ss:$8 sm:$0x30]
        %v544 = vor.u32 %v542, %v543
        %s545 = scalar_lea.vmem %s526, 1
        %v546 = vld [vmem:[%s545] ss:$8 sm:$0x3]
        %s547 = scalar_lea.vmem %s526, 2
        %v548 = vld [vmem:[%s547] ss:$8 sm:$0x3]
        %s549 = scalar_lea.vmem %s526, 3
        %v550 = vld [vmem:[%s549] ss:$8 sm:$0x3]
        %v551 = vpack.c.bf16 %v540, %v540
        %v552 = vpack.c.bf16 %v541, %v541
        %v553 = vld [vmem:[%s421] sm:$0xff]
        %v554 = vld [vmem:[%s421 + $0x8] sm:$0xff]
        %v555 = vld [vmem:[%s421 + $0x10] sm:$0xff]
        %v556 = vld [vmem:[%s421 + $0x18] sm:$0xff]
        %v557 = vld [vmem:[%s421 + $0x20] sm:$0xff]
        %v558 = vld [vmem:[%s421 + $0x28] sm:$0xff]
        %v559 = vld [vmem:[%s421 + $0x30] sm:$0xff]
        %v560 = vld [vmem:[%s421 + $0x38] sm:$0xff]
        %v561 = vld [vmem:[%s421 + $0x40] sm:$0xff]
        %v562 = vld [vmem:[%s421 + $0x48] sm:$0xff]
        %v563 = vld [vmem:[%s421 + $0x50] sm:$0xff]
        %v564 = vld [vmem:[%s421 + $0x58] sm:$0xff]
        %v565 = vld [vmem:[%s421 + $0x60] sm:$0xff]
        %v566 = vld [vmem:[%s421 + $0x68] sm:$0xff]
        %v567 = vld [vmem:[%s421 + $0x70] sm:$0xff]
        %v568 = vld [vmem:[%s421 + $0x78] sm:$0xff]
        %v569 = vld [vmem:[%s421 + $0x80] sm:$0xff]
        %v570 = vld [vmem:[%s421 + $0x88] sm:$0xff]
        %v571 = vld [vmem:[%s421 + $0x90] sm:$0xff]
        %v572 = vld [vmem:[%s421 + $0x98] sm:$0xff]
        %v573 = vld [vmem:[%s421 + $0xa0] sm:$0xff]
        %v574 = vld [vmem:[%s421 + $0xa8] sm:$0xff]
        %v575 = vld [vmem:[%s421 + $0xb0] sm:$0xff]
        %v576 = vld [vmem:[%s421 + $0xb8] sm:$0xff]
        %v577 = vld [vmem:[%s421 + $0xc0] sm:$0xff]
        %v578 = vld [vmem:[%s421 + $0xc8] sm:$0xff]
        %v579 = vld [vmem:[%s421 + $0xd0] sm:$0xff]
        %v580 = vld [vmem:[%s421 + $0xd8] sm:$0xff]
        %v581 = vld [vmem:[%s421 + $0xe0] sm:$0xff]
        %v582 = vld [vmem:[%s421 + $0xe8] sm:$0xff]
        %v583 = vld [vmem:[%s421 + $0xf0] sm:$0xff]
        %v584 = vld [vmem:[%s421 + $0xf8] sm:$0xff]
        %v585 = vld [vmem:[%s421 + $0x100] sm:$0xff]
        %v586 = vld [vmem:[%s421 + $0x108] sm:$0xff]
        %v587 = vld [vmem:[%s421 + $0x110] sm:$0xff]
        %v588 = vld [vmem:[%s421 + $0x118] sm:$0xff]
        %v589 = vld [vmem:[%s421 + $0x120] sm:$0xff]
        %v590 = vld [vmem:[%s421 + $0x128] sm:$0xff]
        %v591 = vld [vmem:[%s421 + $0x130] sm:$0xff]
        %v592 = vld [vmem:[%s421 + $0x138] sm:$0xff]
        %v593 = vld [vmem:[%s421 + $0x140] sm:$0xff]
        %v594 = vld [vmem:[%s421 + $0x148] sm:$0xff]
        %v595 = vld [vmem:[%s421 + $0x150] sm:$0xff]
        %v596 = vld [vmem:[%s421 + $0x158] sm:$0xff]
        %v597 = vld [vmem:[%s421 + $0x160] sm:$0xff]
        %v598 = vld [vmem:[%s421 + $0x168] sm:$0xff]
        %v599 = vld [vmem:[%s421 + $0x170] sm:$0xff]
        %v600 = vld [vmem:[%s421 + $0x178] sm:$0xff]
        %v601 = vld [vmem:[%s421 + $0x180] sm:$0xff]
        %v602 = vld [vmem:[%s421 + $0x188] sm:$0xff]
        %v603 = vld [vmem:[%s421 + $0x190] sm:$0xff]
        %v604 = vld [vmem:[%s421 + $0x198] sm:$0xff]
        %v605 = vld [vmem:[%s421 + $0x1a0] sm:$0xff]
        %v606 = vld [vmem:[%s421 + $0x1a8] sm:$0xff]
        %v607 = vld [vmem:[%s421 + $0x1b0] sm:$0xff]
        %v608 = vld [vmem:[%s421 + $0x1b8] sm:$0xff]
        %v609 = vld [vmem:[%s421 + $0x1c0] sm:$0xff]
        %v610 = vld [vmem:[%s421 + $0x1c8] sm:$0xff]
        %v611 = vld [vmem:[%s421 + $0x1d0] sm:$0xff]
        %v612 = vld [vmem:[%s421 + $0x1d8] sm:$0xff]
        %v613 = vld [vmem:[%s421 + $0x1e0] sm:$0xff]
        %v614 = vld [vmem:[%s421 + $0x1e8] sm:$0xff]
        %v615 = vld [vmem:[%s421 + $0x1f0] sm:$0xff]
        %v616 = vld [vmem:[%s421 + $0x1f8] sm:$0xff]
        %v617 = vld [vmem:[%s421 + $0x200] sm:$0xff]
        %v618 = vld [vmem:[%s421 + $0x208] sm:$0xff]
        %v619 = vld [vmem:[%s421 + $0x210] sm:$0xff]
        %v620 = vld [vmem:[%s421 + $0x218] sm:$0xff]
        %v621 = vld [vmem:[%s421 + $0x220] sm:$0xff]
        %v622 = vld [vmem:[%s421 + $0x228] sm:$0xff]
        %v623 = vld [vmem:[%s421 + $0x230] sm:$0xff]
        %v624 = vld [vmem:[%s421 + $0x238] sm:$0xff]
        %v625 = vld [vmem:[%s421 + $0x240] sm:$0xff]
        %v626 = vld [vmem:[%s421 + $0x248] sm:$0xff]
        %v627 = vld [vmem:[%s421 + $0x250] sm:$0xff]
        %v628 = vld [vmem:[%s421 + $0x258] sm:$0xff]
        %v629 = vld [vmem:[%s421 + $0x260] sm:$0xff]
        %v630 = vld [vmem:[%s421 + $0x268] sm:$0xff]
        %v631 = vld [vmem:[%s421 + $0x270] sm:$0xff]
        %v632 = vld [vmem:[%s421 + $0x278] sm:$0xff]
        %v633 = vld [vmem:[%s421 + $0x280] sm:$0xff]
        %v634 = vld [vmem:[%s421 + $0x288] sm:$0xff]
        %v635 = vld [vmem:[%s421 + $0x290] sm:$0xff]
        %v636 = vld [vmem:[%s421 + $0x298] sm:$0xff]
        %v637 = vld [vmem:[%s421 + $0x2a0] sm:$0xff]
        %v638 = vld [vmem:[%s421 + $0x2a8] sm:$0xff]
        %v639 = vld [vmem:[%s421 + $0x2b0] sm:$0xff]
        %v640 = vld [vmem:[%s421 + $0x2b8] sm:$0xff]
        %v641 = vld [vmem:[%s421 + $0x2c0] sm:$0xff]
        %v642 = vld [vmem:[%s421 + $0x2c8] sm:$0xff]
        %v643 = vld [vmem:[%s421 + $0x2d0] sm:$0xff]
        %v644 = vld [vmem:[%s421 + $0x2d8] sm:$0xff]
        %v645 = vld [vmem:[%s421 + $0x2e0] sm:$0xff]
        %v646 = vld [vmem:[%s421 + $0x2e8] sm:$0xff]
        %v647 = vld [vmem:[%s421 + $0x2f0] sm:$0xff]
        %v648 = vld [vmem:[%s421 + $0x2f8] sm:$0xff]
        %v650 = vperm.slane %v544, 0
        %v651 = vperm.slane %v544, 1
        %v652 = vperm.slane %v544, 2
        %v653 = vperm.slane %v544, 3
        %v654 = vperm.slane %v544, 4
        %v655 = vperm.slane %v544, 5
        %v758 = vunpack.c.l.b16 %v553
        %v759 = vunpack.c.h.b16 %v553
        %v760 = vunpack.c.l.b16 %v554
        %v761 = vunpack.c.h.b16 %v554
        %v762 = vunpack.c.l.b16 %v555
        %v763 = vunpack.c.h.b16 %v555
        %v764 = vunpack.c.l.b16 %v556
        %v765 = vunpack.c.h.b16 %v556
        %v766 = vunpack.c.l.b16 %v557
        %v767 = vunpack.c.h.b16 %v557
        %v768 = vunpack.c.l.b16 %v558
        %v769 = vunpack.c.h.b16 %v558
        %v770 = vunpack.c.l.b16 %v559
        %v771 = vunpack.c.h.b16 %v559
        %v772 = vunpack.c.l.b16 %v560
        %v773 = vunpack.c.h.b16 %v560
        %v774 = vunpack.c.l.b16 %v561
        %v775 = vunpack.c.h.b16 %v561
        %v776 = vunpack.c.l.b16 %v562
        %v777 = vunpack.c.h.b16 %v562
        %v778 = vunpack.c.l.b16 %v563
        %v779 = vunpack.c.h.b16 %v563
        %v780 = vunpack.c.l.b16 %v564
        %v781 = vunpack.c.h.b16 %v564
        %v782 = vunpack.c.l.b16 %v565
        %v783 = vunpack.c.h.b16 %v565
        %v784 = vunpack.c.l.b16 %v566
        %v785 = vunpack.c.h.b16 %v566
        %v786 = vunpack.c.l.b16 %v567
        %v787 = vunpack.c.h.b16 %v567
        %v788 = vunpack.c.l.b16 %v568
        %v789 = vunpack.c.h.b16 %v568
        %v790 = vunpack.c.l.b16 %v569
        %v791 = vunpack.c.h.b16 %v569
        %v792 = vunpack.c.l.b16 %v570
        %v793 = vunpack.c.h.b16 %v570
        %v794 = vunpack.c.l.b16 %v571
        %v795 = vunpack.c.h.b16 %v571
        %v796 = vunpack.c.l.b16 %v572
        %v797 = vunpack.c.h.b16 %v572
        %v798 = vunpack.c.l.b16 %v573
        %v799 = vunpack.c.h.b16 %v573
        %v800 = vunpack.c.l.b16 %v574
        %v801 = vunpack.c.h.b16 %v574
        %v802 = vunpack.c.l.b16 %v575
        %v803 = vunpack.c.h.b16 %v575
        %v804 = vunpack.c.l.b16 %v576
        %v805 = vunpack.c.h.b16 %v576
        %v806 = vunpack.c.l.b16 %v577
        %v807 = vunpack.c.h.b16 %v577
        %v808 = vunpack.c.l.b16 %v578
        %v809 = vunpack.c.h.b16 %v578
        %v810 = vunpack.c.l.b16 %v579
        %v811 = vunpack.c.h.b16 %v579
        %v812 = vunpack.c.l.b16 %v580
        %v813 = vunpack.c.h.b16 %v580
        %v814 = vunpack.c.l.b16 %v581
        %v815 = vunpack.c.h.b16 %v581
        %v816 = vunpack.c.l.b16 %v582
        %v817 = vunpack.c.h.b16 %v582
        %v818 = vunpack.c.l.b16 %v583
        %v819 = vunpack.c.h.b16 %v583
        %v820 = vunpack.c.l.b16 %v584
        %v821 = vunpack.c.h.b16 %v584
        %v822 = vunpack.c.l.b16 %v585
        %v823 = vunpack.c.h.b16 %v585
        %v824 = vunpack.c.l.b16 %v586
        %v825 = vunpack.c.h.b16 %v586
        %v826 = vunpack.c.l.b16 %v587
        %v827 = vunpack.c.h.b16 %v587
        %v828 = vunpack.c.l.b16 %v588
        %v829 = vunpack.c.h.b16 %v588
        %v830 = vunpack.c.l.b16 %v589
        %v831 = vunpack.c.h.b16 %v589
        %v832 = vunpack.c.l.b16 %v590
        %v833 = vunpack.c.h.b16 %v590
        %v834 = vunpack.c.l.b16 %v591
        %v835 = vunpack.c.h.b16 %v591
        %v836 = vunpack.c.l.b16 %v592
        %v837 = vunpack.c.h.b16 %v592
        %v838 = vunpack.c.l.b16 %v593
        %v839 = vunpack.c.h.b16 %v593
        %v840 = vunpack.c.l.b16 %v594
        %v841 = vunpack.c.h.b16 %v594
        %v842 = vunpack.c.l.b16 %v595
        %v843 = vunpack.c.h.b16 %v595
        %v844 = vunpack.c.l.b16 %v596
        %v845 = vunpack.c.h.b16 %v596
        %v846 = vunpack.c.l.b16 %v597
        %v847 = vunpack.c.h.b16 %v597
        %v848 = vunpack.c.l.b16 %v598
        %v849 = vunpack.c.h.b16 %v598
        %v850 = vunpack.c.l.b16 %v599
        %v851 = vunpack.c.h.b16 %v599
        %v852 = vunpack.c.l.b16 %v600
        %v853 = vunpack.c.h.b16 %v600
        %v854 = vunpack.c.l.b16 %v601
        %v855 = vunpack.c.h.b16 %v601
        %v856 = vunpack.c.l.b16 %v602
        %v857 = vunpack.c.h.b16 %v602
        %v858 = vunpack.c.l.b16 %v603
        %v859 = vunpack.c.h.b16 %v603
        %v860 = vunpack.c.l.b16 %v604
        %v861 = vunpack.c.h.b16 %v604
        %v862 = vunpack.c.l.b16 %v605
        %v863 = vunpack.c.h.b16 %v605
        %v864 = vunpack.c.l.b16 %v606
        %v865 = vunpack.c.h.b16 %v606
        %v866 = vunpack.c.l.b16 %v607
        %v867 = vunpack.c.h.b16 %v607
        %v868 = vunpack.c.l.b16 %v608
        %v869 = vunpack.c.h.b16 %v608
        %v870 = vunpack.c.l.b16 %v609
        %v871 = vunpack.c.h.b16 %v609
        %v872 = vunpack.c.l.b16 %v610
        %v873 = vunpack.c.h.b16 %v610
        %v874 = vunpack.c.l.b16 %v611
        %v875 = vunpack.c.h.b16 %v611
        %v876 = vunpack.c.l.b16 %v612
        %v877 = vunpack.c.h.b16 %v612
        %v878 = vunpack.c.l.b16 %v613
        %v879 = vunpack.c.h.b16 %v613
        %v880 = vunpack.c.l.b16 %v614
        %v881 = vunpack.c.h.b16 %v614
        %v882 = vunpack.c.l.b16 %v615
        %v883 = vunpack.c.h.b16 %v615
        %v884 = vunpack.c.l.b16 %v616
        %v885 = vunpack.c.h.b16 %v616
        %v886 = vunpack.c.l.b16 %v617
        %v887 = vunpack.c.h.b16 %v617
        %v888 = vunpack.c.l.b16 %v618
        %v889 = vunpack.c.h.b16 %v618
        %v890 = vunpack.c.l.b16 %v619
        %v891 = vunpack.c.h.b16 %v619
        %v892 = vunpack.c.l.b16 %v620
        %v893 = vunpack.c.h.b16 %v620
        %v894 = vunpack.c.l.b16 %v621
        %v895 = vunpack.c.h.b16 %v621
        %v896 = vunpack.c.l.b16 %v622
        %v897 = vunpack.c.h.b16 %v622
        %v898 = vunpack.c.l.b16 %v623
        %v899 = vunpack.c.h.b16 %v623
        %v900 = vunpack.c.l.b16 %v624
        %v901 = vunpack.c.h.b16 %v624
        %v902 = vunpack.c.l.b16 %v625
        %v903 = vunpack.c.h.b16 %v625
        %v904 = vunpack.c.l.b16 %v626
        %v905 = vunpack.c.h.b16 %v626
        %v906 = vunpack.c.l.b16 %v627
        %v907 = vunpack.c.h.b16 %v627
        %v908 = vunpack.c.l.b16 %v628
        %v909 = vunpack.c.h.b16 %v628
        %v910 = vunpack.c.l.b16 %v629
        %v911 = vunpack.c.h.b16 %v629
        %v912 = vunpack.c.l.b16 %v630
        %v913 = vunpack.c.h.b16 %v630
        %v914 = vunpack.c.l.b16 %v631
        %v915 = vunpack.c.h.b16 %v631
        %v916 = vunpack.c.l.b16 %v632
        %v917 = vunpack.c.h.b16 %v632
        %v918 = vunpack.c.l.b16 %v633
        %v919 = vunpack.c.h.b16 %v633
        %v920 = vunpack.c.l.b16 %v634
        %v921 = vunpack.c.h.b16 %v634
        %v922 = vunpack.c.l.b16 %v635
        %v923 = vunpack.c.h.b16 %v635
        %v924 = vunpack.c.l.b16 %v636
        %v925 = vunpack.c.h.b16 %v636
        %v926 = vunpack.c.l.b16 %v637
        %v927 = vunpack.c.h.b16 %v637
        %v928 = vunpack.c.l.b16 %v638
        %v929 = vunpack.c.h.b16 %v638
        %v930 = vunpack.c.l.b16 %v639
        %v931 = vunpack.c.h.b16 %v639
        %v932 = vunpack.c.l.b16 %v640
        %v933 = vunpack.c.h.b16 %v640
        %v934 = vunpack.c.l.b16 %v641
        %v935 = vunpack.c.h.b16 %v641
        %v936 = vunpack.c.l.b16 %v642
        %v937 = vunpack.c.h.b16 %v642
        %v938 = vunpack.c.l.b16 %v643
        %v939 = vunpack.c.h.b16 %v643
        %v940 = vunpack.c.l.b16 %v644
        %v941 = vunpack.c.h.b16 %v644
        %v942 = vunpack.c.l.b16 %v645
        %v943 = vunpack.c.h.b16 %v645
        %v944 = vunpack.c.l.b16 %v646
        %v945 = vunpack.c.h.b16 %v646
        %v946 = vunpack.c.l.b16 %v647
        %v947 = vunpack.c.h.b16 %v647
        %v948 = vunpack.c.l.b16 %v648
        %v949 = vunpack.c.h.b16 %v648
        %v950 = vpack.c.b16 %v764, %v758
        %v951 = vpack.c.b16 %v765, %v759
        %v952 = vpack.c.b16 %v766, %v760
        %v953 = vpack.c.b16 %v767, %v761
        %v954 = vpack.c.b16 %v768, %v762
        %v955 = vpack.c.b16 %v769, %v763
        %v956 = vpack.c.b16 %v776, %v770
        %v957 = vpack.c.b16 %v777, %v771
        %v958 = vpack.c.b16 %v778, %v772
        %v959 = vpack.c.b16 %v779, %v773
        %v960 = vpack.c.b16 %v780, %v774
        %v961 = vpack.c.b16 %v781, %v775
        %v962 = vpack.c.b16 %v788, %v782
        %v963 = vpack.c.b16 %v789, %v783
        %v964 = vpack.c.b16 %v790, %v784
        %v965 = vpack.c.b16 %v791, %v785
        %v966 = vpack.c.b16 %v792, %v786
        %v967 = vpack.c.b16 %v793, %v787
        %v968 = vpack.c.b16 %v800, %v794
        %v969 = vpack.c.b16 %v801, %v795
        %v970 = vpack.c.b16 %v802, %v796
        %v971 = vpack.c.b16 %v803, %v797
        %v972 = vpack.c.b16 %v804, %v798
        %v973 = vpack.c.b16 %v805, %v799
        %v974 = vpack.c.b16 %v812, %v806
        %v975 = vpack.c.b16 %v813, %v807
        %v976 = vpack.c.b16 %v814, %v808
        %v977 = vpack.c.b16 %v815, %v809
        %v978 = vpack.c.b16 %v816, %v810
        %v979 = vpack.c.b16 %v817, %v811
        %v980 = vpack.c.b16 %v824, %v818
        %v981 = vpack.c.b16 %v825, %v819
        %v982 = vpack.c.b16 %v826, %v820
        %v983 = vpack.c.b16 %v827, %v821
        %v984 = vpack.c.b16 %v828, %v822
        %v985 = vpack.c.b16 %v829, %v823
        %v986 = vpack.c.b16 %v836, %v830
        %v987 = vpack.c.b16 %v837, %v831
        %v988 = vpack.c.b16 %v838, %v832
        %v989 = vpack.c.b16 %v839, %v833
        %v990 = vpack.c.b16 %v840, %v834
        %v991 = vpack.c.b16 %v841, %v835
        %v992 = vpack.c.b16 %v848, %v842
        %v993 = vpack.c.b16 %v849, %v843
        %v994 = vpack.c.b16 %v850, %v844
        %v995 = vpack.c.b16 %v851, %v845
        %v996 = vpack.c.b16 %v852, %v846
        %v997 = vpack.c.b16 %v853, %v847
        %v998 = vpack.c.b16 %v860, %v854
        %v999 = vpack.c.b16 %v861, %v855
        %v1000 = vpack.c.b16 %v862, %v856
        %v1001 = vpack.c.b16 %v863, %v857
        %v1002 = vpack.c.b16 %v864, %v858
        %v1003 = vpack.c.b16 %v865, %v859
        %v1004 = vpack.c.b16 %v872, %v866
        %v1005 = vpack.c.b16 %v873, %v867
        %v1006 = vpack.c.b16 %v874, %v868
        %v1007 = vpack.c.b16 %v875, %v869
        %v1008 = vpack.c.b16 %v876, %v870
        %v1009 = vpack.c.b16 %v877, %v871
        %v1010 = vpack.c.b16 %v884, %v878
        %v1011 = vpack.c.b16 %v885, %v879
        %v1012 = vpack.c.b16 %v886, %v880
        %v1013 = vpack.c.b16 %v887, %v881
        %v1014 = vpack.c.b16 %v888, %v882
        %v1015 = vpack.c.b16 %v889, %v883
        %v1016 = vpack.c.b16 %v896, %v890
        %v1017 = vpack.c.b16 %v897, %v891
        %v1018 = vpack.c.b16 %v898, %v892
        %v1019 = vpack.c.b16 %v899, %v893
        %v1020 = vpack.c.b16 %v900, %v894
        %v1021 = vpack.c.b16 %v901, %v895
        %v1022 = vpack.c.b16 %v908, %v902
        %v1023 = vpack.c.b16 %v909, %v903
        %v1024 = vpack.c.b16 %v910, %v904
        %v1025 = vpack.c.b16 %v911, %v905
        %v1026 = vpack.c.b16 %v912, %v906
        %v1027 = vpack.c.b16 %v913, %v907
        %v1028 = vpack.c.b16 %v920, %v914
        %v1029 = vpack.c.b16 %v921, %v915
        %v1030 = vpack.c.b16 %v922, %v916
        %v1031 = vpack.c.b16 %v923, %v917
        %v1032 = vpack.c.b16 %v924, %v918
        %v1033 = vpack.c.b16 %v925, %v919
        %v1034 = vpack.c.b16 %v932, %v926
        %v1035 = vpack.c.b16 %v933, %v927
        %v1036 = vpack.c.b16 %v934, %v928
        %v1037 = vpack.c.b16 %v935, %v929
        %v1038 = vpack.c.b16 %v936, %v930
        %v1039 = vpack.c.b16 %v937, %v931
        %v1040 = vpack.c.b16 %v944, %v938
        %v1041 = vpack.c.b16 %v945, %v939
        %v1042 = vpack.c.b16 %v946, %v940
        %v1043 = vpack.c.b16 %v947, %v941
        %v1044 = vpack.c.b16 %v948, %v942
        %v1045 = vpack.c.b16 %v949, %v943
        %1142 = vmatpush.bf16.msra.mxu0 %v992
        %1143 = vmatpush.bf16.msra.mxu0 %v986
        %1144 = vmatpush.bf16.msra.mxu0 %v980
        %1145 = vmatpush.bf16.msra.mxu0 %v974
        %1146 = vmatpush.bf16.msra.mxu0 %v968
        %1147 = vmatpush.bf16.msra.mxu0 %v962
        %1148 = vmatpush.bf16.msra.mxu0 %v956
        %1149 = vmatpush.bf16.msra.mxu0 %v950
        %1150 = vmatmul.bf16.gmra.mxu0 %v551
        %v1151 = vpop.f32.mrf.mxu0
        %v1152 = vadd.f32 %v650, %v1151
        %v1153 = vpop.f32.mrf.mxu0
        %1154 = vdwg.mxu0
        %1155 = vmatpush.bf16.msra.mxu0 %v1040
        %1156 = vmatpush.bf16.msra.mxu0 %v1034
        %1157 = vmatpush.bf16.msra.mxu0 %v1028
        %1158 = vmatpush.bf16.msra.mxu0 %v1022
        %1159 = vmatpush.bf16.msra.mxu0 %v1016
        %1160 = vmatpush.bf16.msra.mxu0 %v1010
        %1161 = vmatpush.bf16.msra.mxu0 %v1004
        %1162 = vmatpush.bf16.msra.mxu0 %v998
        %1163 = vmatmul.bf16.gmra.mxu0 %v552
        %v1164 = vpop.f32.mrf.mxu0
        %v1165 = vadd.f32 %v1152, %v1164
        %v1166 = vpop.f32.mrf.mxu0
        %1167 = vdwg.mxu0
        %1168 = vmatpush.bf16.msra.mxu0 %v993
        %1169 = vmatpush.bf16.msra.mxu0 %v987
        %1170 = vmatpush.bf16.msra.mxu0 %v981
        %1171 = vmatpush.bf16.msra.mxu0 %v975
        %1172 = vmatpush.bf16.msra.mxu0 %v969
        %1173 = vmatpush.bf16.msra.mxu0 %v963
        %1174 = vmatpush.bf16.msra.mxu0 %v957
        %1175 = vmatpush.bf16.msra.mxu0 %v951
        %1176 = vmatmul.bf16.gmra.mxu0 %v551
        %v1177 = vpop.f32.mrf.mxu0
        %v1178 = vadd.f32 %v651, %v1177
        %v1179 = vpop.f32.mrf.mxu0
        %1180 = vdwg.mxu0
        %1181 = vmatpush.bf16.msra.mxu0 %v1041
        %1182 = vmatpush.bf16.msra.mxu0 %v1035
        %1183 = vmatpush.bf16.msra.mxu0 %v1029
        %1184 = vmatpush.bf16.msra.mxu0 %v1023
        %1185 = vmatpush.bf16.msra.mxu0 %v1017
        %1186 = vmatpush.bf16.msra.mxu0 %v1011
        %1187 = vmatpush.bf16.msra.mxu0 %v1005
        %1188 = vmatpush.bf16.msra.mxu0 %v999
        %1189 = vmatmul.bf16.gmra.mxu0 %v552
        %v1190 = vpop.f32.mrf.mxu0
        %v1191 = vadd.f32 %v1178, %v1190
        %v1192 = vpop.f32.mrf.mxu0
        %1193 = vdwg.mxu0
        %1194 = vmatpush.bf16.msra.mxu0 %v994
        %1195 = vmatpush.bf16.msra.mxu0 %v988
        %1196 = vmatpush.bf16.msra.mxu0 %v982
        %1197 = vmatpush.bf16.msra.mxu0 %v976
        %1198 = vmatpush.bf16.msra.mxu0 %v970
        %1199 = vmatpush.bf16.msra.mxu0 %v964
        %1200 = vmatpush.bf16.msra.mxu0 %v958
        %1201 = vmatpush.bf16.msra.mxu0 %v952
        %1202 = vmatmul.bf16.gmra.mxu0 %v551
        %v1203 = vpop.f32.mrf.mxu0
        %v1204 = vadd.f32 %v652, %v1203
        %v1205 = vpop.f32.mrf.mxu0
        %1206 = vdwg.mxu0
        %1207 = vmatpush.bf16.msra.mxu0 %v1042
        %1208 = vmatpush.bf16.msra.mxu0 %v1036
        %1209 = vmatpush.bf16.msra.mxu0 %v1030
        %1210 = vmatpush.bf16.msra.mxu0 %v1024
        %1211 = vmatpush.bf16.msra.mxu0 %v1018
        %1212 = vmatpush.bf16.msra.mxu0 %v1012
        %1213 = vmatpush.bf16.msra.mxu0 %v1006
        %1214 = vmatpush.bf16.msra.mxu0 %v1000
        %1215 = vmatmul.bf16.gmra.mxu0 %v552
        %v1216 = vpop.f32.mrf.mxu0
        %v1217 = vadd.f32 %v1204, %v1216
        %v1218 = vpop.f32.mrf.mxu0
        %1219 = vdwg.mxu0
        %1220 = vmatpush.bf16.msra.mxu0 %v995
        %1221 = vmatpush.bf16.msra.mxu0 %v989
        %1222 = vmatpush.bf16.msra.mxu0 %v983
        %1223 = vmatpush.bf16.msra.mxu0 %v977
        %1224 = vmatpush.bf16.msra.mxu0 %v971
        %1225 = vmatpush.bf16.msra.mxu0 %v965
        %1226 = vmatpush.bf16.msra.mxu0 %v959
        %1227 = vmatpush.bf16.msra.mxu0 %v953
        %1228 = vmatmul.bf16.gmra.mxu0 %v551
        %v1229 = vpop.f32.mrf.mxu0
        %v1230 = vadd.f32 %v653, %v1229
        %v1231 = vpop.f32.mrf.mxu0
        %1232 = vdwg.mxu0
        %1233 = vmatpush.bf16.msra.mxu0 %v1043
        %1234 = vmatpush.bf16.msra.mxu0 %v1037
        %1235 = vmatpush.bf16.msra.mxu0 %v1031
        %1236 = vmatpush.bf16.msra.mxu0 %v1025
        %1237 = vmatpush.bf16.msra.mxu0 %v1019
        %1238 = vmatpush.bf16.msra.mxu0 %v1013
        %1239 = vmatpush.bf16.msra.mxu0 %v1007
        %1240 = vmatpush.bf16.msra.mxu0 %v1001
        %1241 = vmatmul.bf16.gmra.mxu0 %v552
        %v1242 = vpop.f32.mrf.mxu0
        %v1243 = vadd.f32 %v1230, %v1242
        %v1244 = vpop.f32.mrf.mxu0
        %1245 = vdwg.mxu0
        %1246 = vmatpush.bf16.msra.mxu0 %v996
        %1247 = vmatpush.bf16.msra.mxu0 %v990
        %1248 = vmatpush.bf16.msra.mxu0 %v984
        %1249 = vmatpush.bf16.msra.mxu0 %v978
        %1250 = vmatpush.bf16.msra.mxu0 %v972
        %1251 = vmatpush.bf16.msra.mxu0 %v966
        %1252 = vmatpush.bf16.msra.mxu0 %v960
        %1253 = vmatpush.bf16.msra.mxu0 %v954
        %1254 = vmatmul.bf16.gmra.mxu0 %v551
        %v1255 = vpop.f32.mrf.mxu0
        %v1256 = vadd.f32 %v654, %v1255
        %v1257 = vpop.f32.mrf.mxu0
        %1258 = vdwg.mxu0
        %1259 = vmatpush.bf16.msra.mxu0 %v1044
        %1260 = vmatpush.bf16.msra.mxu0 %v1038
        %1261 = vmatpush.bf16.msra.mxu0 %v1032
        %1262 = vmatpush.bf16.msra.mxu0 %v1026
        %1263 = vmatpush.bf16.msra.mxu0 %v1020
        %1264 = vmatpush.bf16.msra.mxu0 %v1014
        %1265 = vmatpush.bf16.msra.mxu0 %v1008
        %1266 = vmatpush.bf16.msra.mxu0 %v1002
        %1267 = vmatmul.bf16.gmra.mxu0 %v552
        %v1268 = vpop.f32.mrf.mxu0
        %v1269 = vadd.f32 %v1256, %v1268
        %v1270 = vpop.f32.mrf.mxu0
        %1271 = vdwg.mxu0
        %1272 = vmatpush.bf16.msra.mxu0 %v997
        %1273 = vmatpush.bf16.msra.mxu0 %v991
        %1274 = vmatpush.bf16.msra.mxu0 %v985
        %1275 = vmatpush.bf16.msra.mxu0 %v979
        %1276 = vmatpush.bf16.msra.mxu0 %v973
        %1277 = vmatpush.bf16.msra.mxu0 %v967
        %1278 = vmatpush.bf16.msra.mxu0 %v961
        %1279 = vmatpush.bf16.msra.mxu0 %v955
        %1280 = vmatmul.bf16.gmra.mxu0 %v551
        %v1281 = vpop.f32.mrf.mxu0
        %v1282 = vadd.f32 %v655, %v1281
        %v1283 = vpop.f32.mrf.mxu0
        %1284 = vdwg.mxu0
        %1285 = vmatpush.bf16.msra.mxu0 %v1045
        %1286 = vmatpush.bf16.msra.mxu0 %v1039
        %1287 = vmatpush.bf16.msra.mxu0 %v1033
        %1288 = vmatpush.bf16.msra.mxu0 %v1027
        %1289 = vmatpush.bf16.msra.mxu0 %v1021
        %1290 = vmatpush.bf16.msra.mxu0 %v1015
        %1291 = vmatpush.bf16.msra.mxu0 %v1009
        %1292 = vmatpush.bf16.msra.mxu0 %v1003
        %1293 = vmatmul.bf16.gmra.mxu0 %v552
        %v1294 = vpop.f32.mrf.mxu0
        %v1295 = vadd.f32 %v1282, %v1294
        %v1296 = vpop.f32.mrf.mxu0
        %1297 = vdwg.mxu0
        %v1298 = vpack.c.bf16 %v1165, %v1165
        %v1299 = vpack.c.bf16 %v1217, %v1217
        %v1300 = vpack.c.bf16 %v1269, %v1269
        %1301 = vmatpush.bf16.xpose.msra.mxu0 0
        %1302 = vmatpush.bf16.xpose.msra.mxu0 0
        %1303 = vmatpush.bf16.xpose.msra.mxu0 0
        %1304 = vmatpush.bf16.xpose.msra.mxu0 0
        %1305 = vmatpush.bf16.xpose.msra.mxu0 0
        %1306 = vmatpush.bf16.xpose.msra.mxu0 0
        %1307 = vmatpush.bf16.xpose.msra.mxu0 0
        %1308 = vmatpush.bf16.xpose.msra.mxu0 %v1299
        %1309 = vmatmul.bf16.gmra.mxu0 %v1298
        %v1310 = vpop.f32.mrf.mxu0
        %v1311 = vadd.f32 0.0, %v1310
        %v1312 = vpop.f32.mrf.mxu0
        %1313 = vdwg.mxu0
        %v1314 = vmul.f32 %v1311, 0.088388346
        %vm1315 = vcmask 64512
        %v1316 = vsel %vm1315, %v1314, -inf
        %1317 = vmax.xlane.f32.xlu0 %v1316
        %v1318 = vpop.xlane.xlu0 %1317
        %v1319 = vsub.f32 %v1314, %v1318
        %v1320 = vmul.f32 %v1319, 1.442695
        %v1321 = vpow.pop %v1320
        %v1322 = vsel %vm1315, %v1321, 0.0
        %1323 = vadd.xlane.f32.xlu0 %v1322
        %v1324 = vpop.xlane.xlu0 %1323
        %v1325 = vrcp.pop %v1324
        %v1326 = vmul.f32 %v1321, %v1325
        %v1327 = vpack.c.bf16 %v1326, %v1326
        %v1329 = vsel %vm1315, %v1327, 0
        %vm1331 = vcmask 1043456
        %v1333 = vsel %vm1331, %v1300, 0
        %1335 = vmatpush.bf16.msra.mxu0 0
        %1336 = vmatpush.bf16.msra.mxu0 0
        %1337 = vmatpush.bf16.msra.mxu0 0
        %1338 = vmatpush.bf16.msra.mxu0 0
        %1339 = vmatpush.bf16.msra.mxu0 0
        %1340 = vmatpush.bf16.msra.mxu0 0
        %1341 = vmatpush.bf16.msra.mxu0 0
        %1342 = vmatpush.bf16.msra.mxu0 %v1333
        %1343 = vmatmul.bf16.gmra.mxu0 %v1329
        %v1344 = vpop.f32.mrf.mxu0
        %v1345 = vadd.f32 0.0, %v1344
        %v1346 = vpop.f32.mrf.mxu0
        %1347 = vdwg.mxu0
        %v1348 = vpack.c.bf16 %v1345, %v1345
        %v1349 = vld [vmem:[%s431] sm:$0xff]
        %v1350 = vld [vmem:[%s431 + $0x8] sm:$0xff]
        %v1351 = vld [vmem:[%s431 + $0x10] sm:$0xff]
        %v1352 = vld [vmem:[%s431 + $0x18] sm:$0xff]
        %v1353 = vld [vmem:[%s431 + $0x20] sm:$0xff]
        %v1354 = vld [vmem:[%s431 + $0x28] sm:$0xff]
        %v1355 = vld [vmem:[%s431 + $0x30] sm:$0xff]
        %v1356 = vld [vmem:[%s431 + $0x38] sm:$0xff]
        %v1357 = vld [vmem:[%s431 + $0x40] sm:$0xff]
        %v1358 = vld [vmem:[%s431 + $0x48] sm:$0xff]
        %v1359 = vld [vmem:[%s431 + $0x50] sm:$0xff]
        %v1360 = vld [vmem:[%s431 + $0x58] sm:$0xff]
        %v1361 = vld [vmem:[%s431 + $0x60] sm:$0xff]
        %v1362 = vld [vmem:[%s431 + $0x68] sm:$0xff]
        %v1363 = vld [vmem:[%s431 + $0x70] sm:$0xff]
        %v1364 = vld [vmem:[%s431 + $0x78] sm:$0xff]
        %v1365 = vpack.c.bf16 %v1191, %v1191
        %v1366 = vpack.c.bf16 %v1243, %v1243
        %v1367 = vpack.c.bf16 %v1295, %v1295
        %1368 = vmatpush.bf16.xpose.msra.mxu0 0
        %1369 = vmatpush.bf16.xpose.msra.mxu0 0
        %1370 = vmatpush.bf16.xpose.msra.mxu0 0
        %1371 = vmatpush.bf16.xpose.msra.mxu0 0
        %1372 = vmatpush.bf16.xpose.msra.mxu0 0
        %1373 = vmatpush.bf16.xpose.msra.mxu0 0
        %1374 = vmatpush.bf16.xpose.msra.mxu0 0
        %1375 = vmatpush.bf16.xpose.msra.mxu0 %v1366
        %1376 = vmatmul.bf16.gmra.mxu0 %v1365
        %v1377 = vpop.f32.mrf.mxu0
        %v1378 = vadd.f32 0.0, %v1377
        %v1379 = vpop.f32.mrf.mxu0
        %1380 = vdwg.mxu0
        %v1381 = vmul.f32 %v1378, 0.088388346
        %v1382 = vsel %vm1315, %v1381, -inf
        %1383 = vmax.xlane.f32.xlu0 %v1382
        %v1384 = vpop.xlane.xlu0 %1383
        %v1385 = vsub.f32 %v1381, %v1384
        %v1386 = vmul.f32 %v1385, 1.442695
        %v1387 = vpow.pop %v1386
        %v1388 = vsel %vm1315, %v1387, 0.0
        %1389 = vadd.xlane.f32.xlu0 %v1388
        %v1390 = vpop.xlane.xlu0 %1389
        %v1391 = vrcp.pop %v1390
        %v1392 = vmul.f32 %v1387, %v1391
        %v1393 = vpack.c.bf16 %v1392, %v1392
        %v1395 = vsel %vm1315, %v1393, 0
        %v1398 = vsel %vm1331, %v1367, 0
        %1400 = vmatpush.bf16.msra.mxu0 0
        %1401 = vmatpush.bf16.msra.mxu0 0
        %1402 = vmatpush.bf16.msra.mxu0 0
        %1403 = vmatpush.bf16.msra.mxu0 0
        %1404 = vmatpush.bf16.msra.mxu0 0
        %1405 = vmatpush.bf16.msra.mxu0 0
        %1406 = vmatpush.bf16.msra.mxu0 0
        %1407 = vmatpush.bf16.msra.mxu0 %v1398
        %1408 = vmatmul.bf16.gmra.mxu0 %v1395
        %v1409 = vpop.f32.mrf.mxu0
        %v1410 = vadd.f32 0.0, %v1409
        %v1411 = vpop.f32.mrf.mxu0
        %1412 = vdwg.mxu0
        %v1413 = vpack.c.bf16 %v1410, %v1410
        %v1414 = vld [vmem:[%s431 + $0x80] sm:$0xff]
        %v1415 = vld [vmem:[%s431 + $0x88] sm:$0xff]
        %v1416 = vld [vmem:[%s431 + $0x90] sm:$0xff]
        %v1417 = vld [vmem:[%s431 + $0x98] sm:$0xff]
        %v1418 = vld [vmem:[%s431 + $0xa0] sm:$0xff]
        %v1419 = vld [vmem:[%s431 + $0xa8] sm:$0xff]
        %v1420 = vld [vmem:[%s431 + $0xb0] sm:$0xff]
        %v1421 = vld [vmem:[%s431 + $0xb8] sm:$0xff]
        %v1422 = vld [vmem:[%s431 + $0xc0] sm:$0xff]
        %v1423 = vld [vmem:[%s431 + $0xc8] sm:$0xff]
        %v1424 = vld [vmem:[%s431 + $0xd0] sm:$0xff]
        %v1425 = vld [vmem:[%s431 + $0xd8] sm:$0xff]
        %v1426 = vld [vmem:[%s431 + $0xe0] sm:$0xff]
        %v1427 = vld [vmem:[%s431 + $0xe8] sm:$0xff]
        %v1428 = vld [vmem:[%s431 + $0xf0] sm:$0xff]
        %v1429 = vld [vmem:[%s431 + $0xf8] sm:$0xff]
        %v1446 = vunpack.c.l.b16 %v1414
        %v1447 = vunpack.c.h.b16 %v1414
        %v1448 = vunpack.c.l.b16 %v1415
        %v1449 = vunpack.c.h.b16 %v1415
        %v1450 = vunpack.c.l.b16 %v1416
        %v1451 = vunpack.c.h.b16 %v1416
        %v1452 = vunpack.c.l.b16 %v1417
        %v1453 = vunpack.c.h.b16 %v1417
        %v1454 = vunpack.c.l.b16 %v1418
        %v1455 = vunpack.c.h.b16 %v1418
        %v1456 = vunpack.c.l.b16 %v1419
        %v1457 = vunpack.c.h.b16 %v1419
        %v1458 = vunpack.c.l.b16 %v1420
        %v1459 = vunpack.c.h.b16 %v1420
        %v1460 = vunpack.c.l.b16 %v1421
        %v1461 = vunpack.c.h.b16 %v1421
        %v1462 = vunpack.c.l.b16 %v1422
        %v1463 = vunpack.c.h.b16 %v1422
        %v1464 = vunpack.c.l.b16 %v1423
        %v1465 = vunpack.c.h.b16 %v1423
        %v1466 = vunpack.c.l.b16 %v1424
        %v1467 = vunpack.c.h.b16 %v1424
        %v1468 = vunpack.c.l.b16 %v1425
        %v1469 = vunpack.c.h.b16 %v1425
        %v1470 = vunpack.c.l.b16 %v1426
        %v1471 = vunpack.c.h.b16 %v1426
        %v1472 = vunpack.c.l.b16 %v1427
        %v1473 = vunpack.c.h.b16 %v1427
        %v1474 = vunpack.c.l.b16 %v1428
        %v1475 = vunpack.c.h.b16 %v1428
        %v1476 = vunpack.c.l.b16 %v1429
        %v1477 = vunpack.c.h.b16 %v1429
        %v1478 = vpack.c.b16 %v1448, %v1446
        %v1479 = vpack.c.b16 %v1449, %v1447
        %v1480 = vpack.c.b16 %v1452, %v1450
        %v1481 = vpack.c.b16 %v1453, %v1451
        %v1482 = vpack.c.b16 %v1456, %v1454
        %v1483 = vpack.c.b16 %v1457, %v1455
        %v1484 = vpack.c.b16 %v1460, %v1458
        %v1485 = vpack.c.b16 %v1461, %v1459
        %v1486 = vpack.c.b16 %v1464, %v1462
        %v1487 = vpack.c.b16 %v1465, %v1463
        %v1488 = vpack.c.b16 %v1468, %v1466
        %v1489 = vpack.c.b16 %v1469, %v1467
        %v1490 = vpack.c.b16 %v1472, %v1470
        %v1491 = vpack.c.b16 %v1473, %v1471
        %v1492 = vpack.c.b16 %v1476, %v1474
        %v1493 = vpack.c.b16 %v1477, %v1475
        %1510 = vmatpush.bf16.msra.mxu0 %v1492
        %1511 = vmatpush.bf16.msra.mxu0 %v1490
        %1512 = vmatpush.bf16.msra.mxu0 %v1488
        %1513 = vmatpush.bf16.msra.mxu0 %v1486
        %1514 = vmatpush.bf16.msra.mxu0 %v1484
        %1515 = vmatpush.bf16.msra.mxu0 %v1482
        %1516 = vmatpush.bf16.msra.mxu0 %v1480
        %1517 = vmatpush.bf16.msra.mxu0 %v1478
        %1518 = vmatmul.bf16.gmra.mxu0 %v1413
        %v1519 = vpop.f32.mrf.mxu0
        %v1520 = vadd.f32 0.0, %v1519
        %v1521 = vpop.f32.mrf.mxu0
        %1522 = vdwg.mxu0
        %1523 = vmatpush.bf16.msra.mxu0 %v1493
        %1524 = vmatpush.bf16.msra.mxu0 %v1491
        %1525 = vmatpush.bf16.msra.mxu0 %v1489
        %1526 = vmatpush.bf16.msra.mxu0 %v1487
        %1527 = vmatpush.bf16.msra.mxu0 %v1485
        %1528 = vmatpush.bf16.msra.mxu0 %v1483
        %1529 = vmatpush.bf16.msra.mxu0 %v1481
        %1530 = vmatpush.bf16.msra.mxu0 %v1479
        %1531 = vmatmul.bf16.gmra.mxu0 %v1413
        %v1532 = vpop.f32.mrf.mxu0
        %v1533 = vadd.f32 0.0, %v1532
        %v1534 = vpop.f32.mrf.mxu0
        %1535 = vdwg.mxu0
        %v1552 = vunpack.c.l.b16 %v1349
        %v1553 = vunpack.c.h.b16 %v1349
        %v1554 = vunpack.c.l.b16 %v1350
        %v1555 = vunpack.c.h.b16 %v1350
        %v1556 = vunpack.c.l.b16 %v1351
        %v1557 = vunpack.c.h.b16 %v1351
        %v1558 = vunpack.c.l.b16 %v1352
        %v1559 = vunpack.c.h.b16 %v1352
        %v1560 = vunpack.c.l.b16 %v1353
        %v1561 = vunpack.c.h.b16 %v1353
        %v1562 = vunpack.c.l.b16 %v1354
        %v1563 = vunpack.c.h.b16 %v1354
        %v1564 = vunpack.c.l.b16 %v1355
        %v1565 = vunpack.c.h.b16 %v1355
        %v1566 = vunpack.c.l.b16 %v1356
        %v1567 = vunpack.c.h.b16 %v1356
        %v1568 = vunpack.c.l.b16 %v1357
        %v1569 = vunpack.c.h.b16 %v1357
        %v1570 = vunpack.c.l.b16 %v1358
        %v1571 = vunpack.c.h.b16 %v1358
        %v1572 = vunpack.c.l.b16 %v1359
        %v1573 = vunpack.c.h.b16 %v1359
        %v1574 = vunpack.c.l.b16 %v1360
        %v1575 = vunpack.c.h.b16 %v1360
        %v1576 = vunpack.c.l.b16 %v1361
        %v1577 = vunpack.c.h.b16 %v1361
        %v1578 = vunpack.c.l.b16 %v1362
        %v1579 = vunpack.c.h.b16 %v1362
        %v1580 = vunpack.c.l.b16 %v1363
        %v1581 = vunpack.c.h.b16 %v1363
        %v1582 = vunpack.c.l.b16 %v1364
        %v1583 = vunpack.c.h.b16 %v1364
        %v1584 = vpack.c.b16 %v1554, %v1552
        %v1585 = vpack.c.b16 %v1555, %v1553
        %v1586 = vpack.c.b16 %v1558, %v1556
        %v1587 = vpack.c.b16 %v1559, %v1557
        %v1588 = vpack.c.b16 %v1562, %v1560
        %v1589 = vpack.c.b16 %v1563, %v1561
        %v1590 = vpack.c.b16 %v1566, %v1564
        %v1591 = vpack.c.b16 %v1567, %v1565
        %v1592 = vpack.c.b16 %v1570, %v1568
        %v1593 = vpack.c.b16 %v1571, %v1569
        %v1594 = vpack.c.b16 %v1574, %v1572
        %v1595 = vpack.c.b16 %v1575, %v1573
        %v1596 = vpack.c.b16 %v1578, %v1576
        %v1597 = vpack.c.b16 %v1579, %v1577
        %v1598 = vpack.c.b16 %v1582, %v1580
        %v1599 = vpack.c.b16 %v1583, %v1581
        %1616 = vmatpush.bf16.msra.mxu0 %v1598
        %1617 = vmatpush.bf16.msra.mxu0 %v1596
        %1618 = vmatpush.bf16.msra.mxu0 %v1594
        %1619 = vmatpush.bf16.msra.mxu0 %v1592
        %1620 = vmatpush.bf16.msra.mxu0 %v1590
        %1621 = vmatpush.bf16.msra.mxu0 %v1588
        %1622 = vmatpush.bf16.msra.mxu0 %v1586
        %1623 = vmatpush.bf16.msra.mxu0 %v1584
        %1624 = vmatmul.bf16.gmra.mxu0 %v1348
        %v1625 = vpop.f32.mrf.mxu0
        %v1626 = vadd.f32 %v1520, %v1625
        %v1627 = vpop.f32.mrf.mxu0
        %1628 = vdwg.mxu0
        %1629 = vmatpush.bf16.msra.mxu0 %v1599
        %1630 = vmatpush.bf16.msra.mxu0 %v1597
        %1631 = vmatpush.bf16.msra.mxu0 %v1595
        %1632 = vmatpush.bf16.msra.mxu0 %v1593
        %1633 = vmatpush.bf16.msra.mxu0 %v1591
        %1634 = vmatpush.bf16.msra.mxu0 %v1589
        %1635 = vmatpush.bf16.msra.mxu0 %v1587
        %1636 = vmatpush.bf16.msra.mxu0 %v1585
        %1637 = vmatmul.bf16.gmra.mxu0 %v1348
        %v1638 = vpop.f32.mrf.mxu0
        %v1639 = vadd.f32 %v1533, %v1638
        %v1640 = vpop.f32.mrf.mxu0
        %1641 = vdwg.mxu0
        %v1643 = vperm.slane %v546, 0
        %v1644 = vperm.slane %v546, 1
        %v1647 = vadd.f32 %v1626, %v1643
        %v1648 = vadd.f32 %v1639, %v1644
        %v1649 = vadd.f32 %v540, %v1647
        %v1650 = vadd.f32 %v541, %v1648
        %v1651 = vadd.f32 %v1649, %v1650
        %1652 = vadd.xlane.f32.xlu0 %v1651
        %v1653 = vpop.xlane.xlu0 %1652
        %v1654 = vrcp.pop 256.0
        %v1655 = vmul.f32 256.0, %v1654
        %v1656 = vsub.f32 1.0, %v1655
        %v1657 = vmul.f32 %v1654, %v1656
        %v1658 = vadd.f32 %v1654, %v1657
        %vm1659 = vweird.f32 %v1654
        %v1660 = vsel %vm1659, %v1654, %v1658
        %v1661 = vmul.f32 %v1653, %v1660
        %v1662 = vsub.f32 %v1649, %v1661
        %v1663 = vsub.f32 %v1650, %v1661
        %v1664 = vmul.f32 %v1662, %v1662
        %v1665 = vmul.f32 %v1663, %v1663
        %v1666 = vadd.f32 %v1664, %v1665
        %1667 = vadd.xlane.f32.xlu0 %v1666
        %v1668 = vpop.xlane.xlu0 %1667
        %v1669 = vmul.f32 %v1668, %v1660
        %v1670 = vadd.f32 %v1669, 1e-05
        %v1671 = vrsqrt.pop %v1670
        %v1672 = vmul.f32 %v1671, %v1670
        %v1673 = vmul.f32 %v1672, %v1671
        %v1674 = vmul.f32 0.5, %v1673
        %v1675 = vsub.f32 1.5, %v1674
        %v1676 = vmul.f32 %v1671, %v1675
        %vm1677 = vweird.f32 %v1670
        %vm1678 = vweird.f32 %v1671
        %vm1679 = vmor %vm1677, %vm1678
        %v1680 = vsel %vm1679, %v1671, %v1676
        %v1681 = vmul.f32 %v1662, %v1680
        %v1682 = vmul.f32 %v1663, %v1680
        %v1684 = vperm.slane %v548, 0
        %v1685 = vperm.slane %v548, 1
        %v1688 = vmul.f32 %v1681, %v1684
        %v1689 = vmul.f32 %v1682, %v1685
        %v1691 = vperm.slane %v550, 0
        %v1692 = vperm.slane %v550, 1
        %v1695 = vadd.f32 %v1688, %v1691
        %v1696 = vadd.f32 %v1689, %v1692
        %p1697 = scmp.lt.s32.totalorder %s35, 2
        // Predicated region
        $region73: #{transformer_encoder_forward.1} parent=47 // pred_check
          %p1698 = pneg %p1697
        $region74: #{transformer_encoder_forward.1} parent=47 // pred_check_branch
          %1700 = sbr.rel (%p1698) target = $region76
        $region75: #{transformer_encoder_forward.1} parent=47 // pred_region
          %s1701 = scalar_lea.vmem %s526, 4
          %v1702 = vld [vmem:[%s1701] ss:$8 sm:$0xf]
          %s1703 = scalar_lea.vmem %s526, 5
          %v1704 = vld [vmem:[%s1703] ss:$8 sm:$0x3]
          %s1705 = scalar_lea.vmem %s526, 6
          %v1706 = vld [vmem:[%s1705] ss:$8 sm:$0x3]
          %s1707 = scalar_lea.vmem %s526, 7
          %v1708 = vld [vmem:[%s1707] ss:$8 sm:$0x3]
          %v1709 = vpack.c.bf16 %v1695, %v1695
          %v1710 = vpack.c.bf16 %v1696, %v1696
          %v1711 = vld [vmem:[%s441] sm:$0xff]
          %v1712 = vld [vmem:[%s441 + $0x8] sm:$0xff]
          %v1713 = vld [vmem:[%s441 + $0x10] sm:$0xff]
          %v1714 = vld [vmem:[%s441 + $0x18] sm:$0xff]
          %v1715 = vld [vmem:[%s441 + $0x20] sm:$0xff]
          %v1716 = vld [vmem:[%s441 + $0x28] sm:$0xff]
          %v1717 = vld [vmem:[%s441 + $0x30] sm:$0xff]
          %v1718 = vld [vmem:[%s441 + $0x38] sm:$0xff]
          %v1719 = vld [vmem:[%s441 + $0x40] sm:$0xff]
          %v1720 = vld [vmem:[%s441 + $0x48] sm:$0xff]
          %v1721 = vld [vmem:[%s441 + $0x50] sm:$0xff]
          %v1722 = vld [vmem:[%s441 + $0x58] sm:$0xff]
          %v1723 = vld [vmem:[%s441 + $0x60] sm:$0xff]
          %v1724 = vld [vmem:[%s441 + $0x68] sm:$0xff]
          %v1725 = vld [vmem:[%s441 + $0x70] sm:$0xff]
          %v1726 = vld [vmem:[%s441 + $0x78] sm:$0xff]
          %v1727 = vld [vmem:[%s441 + $0x80] sm:$0xff]
          %v1728 = vld [vmem:[%s441 + $0x88] sm:$0xff]
          %v1729 = vld [vmem:[%s441 + $0x90] sm:$0xff]
          %v1730 = vld [vmem:[%s441 + $0x98] sm:$0xff]
          %v1731 = vld [vmem:[%s441 + $0xa0] sm:$0xff]
          %v1732 = vld [vmem:[%s441 + $0xa8] sm:$0xff]
          %v1733 = vld [vmem:[%s441 + $0xb0] sm:$0xff]
          %v1734 = vld [vmem:[%s441 + $0xb8] sm:$0xff]
          %v1735 = vld [vmem:[%s441 + $0xc0] sm:$0xff]
          %v1736 = vld [vmem:[%s441 + $0xc8] sm:$0xff]
          %v1737 = vld [vmem:[%s441 + $0xd0] sm:$0xff]
          %v1738 = vld [vmem:[%s441 + $0xd8] sm:$0xff]
          %v1739 = vld [vmem:[%s441 + $0xe0] sm:$0xff]
          %v1740 = vld [vmem:[%s441 + $0xe8] sm:$0xff]
          %v1741 = vld [vmem:[%s441 + $0xf0] sm:$0xff]
          %v1742 = vld [vmem:[%s441 + $0xf8] sm:$0xff]
          %v1743 = vld [vmem:[%s441 + $0x100] sm:$0xff]
          %v1744 = vld [vmem:[%s441 + $0x108] sm:$0xff]
          %v1745 = vld [vmem:[%s441 + $0x110] sm:$0xff]
          %v1746 = vld [vmem:[%s441 + $0x118] sm:$0xff]
          %v1747 = vld [vmem:[%s441 + $0x120] sm:$0xff]
          %v1748 = vld [vmem:[%s441 + $0x128] sm:$0xff]
          %v1749 = vld [vmem:[%s441 + $0x130] sm:$0xff]
          %v1750 = vld [vmem:[%s441 + $0x138] sm:$0xff]
          %v1751 = vld [vmem:[%s441 + $0x140] sm:$0xff]
          %v1752 = vld [vmem:[%s441 + $0x148] sm:$0xff]
          %v1753 = vld [vmem:[%s441 + $0x150] sm:$0xff]
          %v1754 = vld [vmem:[%s441 + $0x158] sm:$0xff]
          %v1755 = vld [vmem:[%s441 + $0x160] sm:$0xff]
          %v1756 = vld [vmem:[%s441 + $0x168] sm:$0xff]
          %v1757 = vld [vmem:[%s441 + $0x170] sm:$0xff]
          %v1758 = vld [vmem:[%s441 + $0x178] sm:$0xff]
          %v1759 = vld [vmem:[%s441 + $0x180] sm:$0xff]
          %v1760 = vld [vmem:[%s441 + $0x188] sm:$0xff]
          %v1761 = vld [vmem:[%s441 + $0x190] sm:$0xff]
          %v1762 = vld [vmem:[%s441 + $0x198] sm:$0xff]
          %v1763 = vld [vmem:[%s441 + $0x1a0] sm:$0xff]
          %v1764 = vld [vmem:[%s441 + $0x1a8] sm:$0xff]
          %v1765 = vld [vmem:[%s441 + $0x1b0] sm:$0xff]
          %v1766 = vld [vmem:[%s441 + $0x1b8] sm:$0xff]
          %v1767 = vld [vmem:[%s441 + $0x1c0] sm:$0xff]
          %v1768 = vld [vmem:[%s441 + $0x1c8] sm:$0xff]
          %v1769 = vld [vmem:[%s441 + $0x1d0] sm:$0xff]
          %v1770 = vld [vmem:[%s441 + $0x1d8] sm:$0xff]
          %v1771 = vld [vmem:[%s441 + $0x1e0] sm:$0xff]
          %v1772 = vld [vmem:[%s441 + $0x1e8] sm:$0xff]
          %v1773 = vld [vmem:[%s441 + $0x1f0] sm:$0xff]
          %v1774 = vld [vmem:[%s441 + $0x1f8] sm:$0xff]
          %v1776 = vperm.slane %v1702, 0
          %v1777 = vperm.slane %v1702, 1
          %v1778 = vperm.slane %v1702, 2
          %v1779 = vperm.slane %v1702, 3
          %v1848 = vunpack.c.l.b16 %v1711
          %v1849 = vunpack.c.h.b16 %v1711
          %v1850 = vunpack.c.l.b16 %v1712
          %v1851 = vunpack.c.h.b16 %v1712
          %v1852 = vunpack.c.l.b16 %v1713
          %v1853 = vunpack.c.h.b16 %v1713
          %v1854 = vunpack.c.l.b16 %v1714
          %v1855 = vunpack.c.h.b16 %v1714
          %v1856 = vunpack.c.l.b16 %v1715
          %v1857 = vunpack.c.h.b16 %v1715
          %v1858 = vunpack.c.l.b16 %v1716
          %v1859 = vunpack.c.h.b16 %v1716
          %v1860 = vunpack.c.l.b16 %v1717
          %v1861 = vunpack.c.h.b16 %v1717
          %v1862 = vunpack.c.l.b16 %v1718
          %v1863 = vunpack.c.h.b16 %v1718
          %v1864 = vunpack.c.l.b16 %v1719
          %v1865 = vunpack.c.h.b16 %v1719
          %v1866 = vunpack.c.l.b16 %v1720
          %v1867 = vunpack.c.h.b16 %v1720
          %v1868 = vunpack.c.l.b16 %v1721
          %v1869 = vunpack.c.h.b16 %v1721
          %v1870 = vunpack.c.l.b16 %v1722
          %v1871 = vunpack.c.h.b16 %v1722
          %v1872 = vunpack.c.l.b16 %v1723
          %v1873 = vunpack.c.h.b16 %v1723
          %v1874 = vunpack.c.l.b16 %v1724
          %v1875 = vunpack.c.h.b16 %v1724
          %v1876 = vunpack.c.l.b16 %v1725
          %v1877 = vunpack.c.h.b16 %v1725
          %v1878 = vunpack.c.l.b16 %v1726
          %v1879 = vunpack.c.h.b16 %v1726
          %v1880 = vunpack.c.l.b16 %v1727
          %v1881 = vunpack.c.h.b16 %v1727
          %v1882 = vunpack.c.l.b16 %v1728
          %v1883 = vunpack.c.h.b16 %v1728
          %v1884 = vunpack.c.l.b16 %v1729
          %v1885 = vunpack.c.h.b16 %v1729
          %v1886 = vunpack.c.l.b16 %v1730
          %v1887 = vunpack.c.h.b16 %v1730
          %v1888 = vunpack.c.l.b16 %v1731
          %v1889 = vunpack.c.h.b16 %v1731
          %v1890 = vunpack.c.l.b16 %v1732
          %v1891 = vunpack.c.h.b16 %v1732
          %v1892 = vunpack.c.l.b16 %v1733
          %v1893 = vunpack.c.h.b16 %v1733
          %v1894 = vunpack.c.l.b16 %v1734
          %v1895 = vunpack.c.h.b16 %v1734
          %v1896 = vunpack.c.l.b16 %v1735
          %v1897 = vunpack.c.h.b16 %v1735
          %v1898 = vunpack.c.l.b16 %v1736
          %v1899 = vunpack.c.h.b16 %v1736
          %v1900 = vunpack.c.l.b16 %v1737
          %v1901 = vunpack.c.h.b16 %v1737
          %v1902 = vunpack.c.l.b16 %v1738
          %v1903 = vunpack.c.h.b16 %v1738
          %v1904 = vunpack.c.l.b16 %v1739
          %v1905 = vunpack.c.h.b16 %v1739
          %v1906 = vunpack.c.l.b16 %v1740
          %v1907 = vunpack.c.h.b16 %v1740
          %v1908 = vunpack.c.l.b16 %v1741
          %v1909 = vunpack.c.h.b16 %v1741
          %v1910 = vunpack.c.l.b16 %v1742
          %v1911 = vunpack.c.h.b16 %v1742
          %v1912 = vunpack.c.l.b16 %v1743
          %v1913 = vunpack.c.h.b16 %v1743
          %v1914 = vunpack.c.l.b16 %v1744
          %v1915 = vunpack.c.h.b16 %v1744
          %v1916 = vunpack.c.l.b16 %v1745
          %v1917 = vunpack.c.h.b16 %v1745
          %v1918 = vunpack.c.l.b16 %v1746
          %v1919 = vunpack.c.h.b16 %v1746
          %v1920 = vunpack.c.l.b16 %v1747
          %v1921 = vunpack.c.h.b16 %v1747
          %v1922 = vunpack.c.l.b16 %v1748
          %v1923 = vunpack.c.h.b16 %v1748
          %v1924 = vunpack.c.l.b16 %v1749
          %v1925 = vunpack.c.h.b16 %v1749
          %v1926 = vunpack.c.l.b16 %v1750
          %v1927 = vunpack.c.h.b16 %v1750
          %v1928 = vunpack.c.l.b16 %v1751
          %v1929 = vunpack.c.h.b16 %v1751
          %v1930 = vunpack.c.l.b16 %v1752
          %v1931 = vunpack.c.h.b16 %v1752
          %v1932 = vunpack.c.l.b16 %v1753
          %v1933 = vunpack.c.h.b16 %v1753
          %v1934 = vunpack.c.l.b16 %v1754
          %v1935 = vunpack.c.h.b16 %v1754
          %v1936 = vunpack.c.l.b16 %v1755
          %v1937 = vunpack.c.h.b16 %v1755
          %v1938 = vunpack.c.l.b16 %v1756
          %v1939 = vunpack.c.h.b16 %v1756
          %v1940 = vunpack.c.l.b16 %v1757
          %v1941 = vunpack.c.h.b16 %v1757
          %v1942 = vunpack.c.l.b16 %v1758
          %v1943 = vunpack.c.h.b16 %v1758
          %v1944 = vunpack.c.l.b16 %v1759
          %v1945 = vunpack.c.h.b16 %v1759
          %v1946 = vunpack.c.l.b16 %v1760
          %v1947 = vunpack.c.h.b16 %v1760
          %v1948 = vunpack.c.l.b16 %v1761
          %v1949 = vunpack.c.h.b16 %v1761
          %v1950 = vunpack.c.l.b16 %v1762
          %v1951 = vunpack.c.h.b16 %v1762
          %v1952 = vunpack.c.l.b16 %v1763
          %v1953 = vunpack.c.h.b16 %v1763
          %v1954 = vunpack.c.l.b16 %v1764
          %v1955 = vunpack.c.h.b16 %v1764
          %v1956 = vunpack.c.l.b16 %v1765
          %v1957 = vunpack.c.h.b16 %v1765
          %v1958 = vunpack.c.l.b16 %v1766
          %v1959 = vunpack.c.h.b16 %v1766
          %v1960 = vunpack.c.l.b16 %v1767
          %v1961 = vunpack.c.h.b16 %v1767
          %v1962 = vunpack.c.l.b16 %v1768
          %v1963 = vunpack.c.h.b16 %v1768
          %v1964 = vunpack.c.l.b16 %v1769
          %v1965 = vunpack.c.h.b16 %v1769
          %v1966 = vunpack.c.l.b16 %v1770
          %v1967 = vunpack.c.h.b16 %v1770
          %v1968 = vunpack.c.l.b16 %v1771
          %v1969 = vunpack.c.h.b16 %v1771
          %v1970 = vunpack.c.l.b16 %v1772
          %v1971 = vunpack.c.h.b16 %v1772
          %v1972 = vunpack.c.l.b16 %v1773
          %v1973 = vunpack.c.h.b16 %v1773
          %v1974 = vunpack.c.l.b16 %v1774
          %v1975 = vunpack.c.h.b16 %v1774
          %v1976 = vpack.c.b16 %v1852, %v1848
          %v1977 = vpack.c.b16 %v1853, %v1849
          %v1978 = vpack.c.b16 %v1854, %v1850
          %v1979 = vpack.c.b16 %v1855, %v1851
          %v1980 = vpack.c.b16 %v1860, %v1856
          %v1981 = vpack.c.b16 %v1861, %v1857
          %v1982 = vpack.c.b16 %v1862, %v1858
          %v1983 = vpack.c.b16 %v1863, %v1859
          %v1984 = vpack.c.b16 %v1868, %v1864
          %v1985 = vpack.c.b16 %v1869, %v1865
          %v1986 = vpack.c.b16 %v1870, %v1866
          %v1987 = vpack.c.b16 %v1871, %v1867
          %v1988 = vpack.c.b16 %v1876, %v1872
          %v1989 = vpack.c.b16 %v1877, %v1873
          %v1990 = vpack.c.b16 %v1878, %v1874
          %v1991 = vpack.c.b16 %v1879, %v1875
          %v1992 = vpack.c.b16 %v1884, %v1880
          %v1993 = vpack.c.b16 %v1885, %v1881
          %v1994 = vpack.c.b16 %v1886, %v1882
          %v1995 = vpack.c.b16 %v1887, %v1883
          %v1996 = vpack.c.b16 %v1892, %v1888
          %v1997 = vpack.c.b16 %v1893, %v1889
          %v1998 = vpack.c.b16 %v1894, %v1890
          %v1999 = vpack.c.b16 %v1895, %v1891
          %v2000 = vpack.c.b16 %v1900, %v1896
          %v2001 = vpack.c.b16 %v1901, %v1897
          %v2002 = vpack.c.b16 %v1902, %v1898
          %v2003 = vpack.c.b16 %v1903, %v1899
          %v2004 = vpack.c.b16 %v1908, %v1904
          %v2005 = vpack.c.b16 %v1909, %v1905
          %v2006 = vpack.c.b16 %v1910, %v1906
          %v2007 = vpack.c.b16 %v1911, %v1907
          %v2008 = vpack.c.b16 %v1916, %v1912
          %v2009 = vpack.c.b16 %v1917, %v1913
          %v2010 = vpack.c.b16 %v1918, %v1914
          %v2011 = vpack.c.b16 %v1919, %v1915
          %v2012 = vpack.c.b16 %v1924, %v1920
          %v2013 = vpack.c.b16 %v1925, %v1921
          %v2014 = vpack.c.b16 %v1926, %v1922
          %v2015 = vpack.c.b16 %v1927, %v1923
          %v2016 = vpack.c.b16 %v1932, %v1928
          %v2017 = vpack.c.b16 %v1933, %v1929
          %v2018 = vpack.c.b16 %v1934, %v1930
          %v2019 = vpack.c.b16 %v1935, %v1931
          %v2020 = vpack.c.b16 %v1940, %v1936
          %v2021 = vpack.c.b16 %v1941, %v1937
          %v2022 = vpack.c.b16 %v1942, %v1938
          %v2023 = vpack.c.b16 %v1943, %v1939
          %v2024 = vpack.c.b16 %v1948, %v1944
          %v2025 = vpack.c.b16 %v1949, %v1945
          %v2026 = vpack.c.b16 %v1950, %v1946
          %v2027 = vpack.c.b16 %v1951, %v1947
          %v2028 = vpack.c.b16 %v1956, %v1952
          %v2029 = vpack.c.b16 %v1957, %v1953
          %v2030 = vpack.c.b16 %v1958, %v1954
          %v2031 = vpack.c.b16 %v1959, %v1955
          %v2032 = vpack.c.b16 %v1964, %v1960
          %v2033 = vpack.c.b16 %v1965, %v1961
          %v2034 = vpack.c.b16 %v1966, %v1962
          %v2035 = vpack.c.b16 %v1967, %v1963
          %v2036 = vpack.c.b16 %v1972, %v1968
          %v2037 = vpack.c.b16 %v1973, %v1969
          %v2038 = vpack.c.b16 %v1974, %v1970
          %v2039 = vpack.c.b16 %v1975, %v1971
          %2104 = vmatpush.bf16.msra.mxu0 %v2004
          %2105 = vmatpush.bf16.msra.mxu0 %v2000
          %2106 = vmatpush.bf16.msra.mxu0 %v1996
          %2107 = vmatpush.bf16.msra.mxu0 %v1992
          %2108 = vmatpush.bf16.msra.mxu0 %v1988
          %2109 = vmatpush.bf16.msra.mxu0 %v1984
          %2110 = vmatpush.bf16.msra.mxu0 %v1980
          %2111 = vmatpush.bf16.msra.mxu0 %v1976
          %2112 = vmatmul.bf16.gmra.mxu0 %v1709
          %v2113 = vpop.f32.mrf.mxu0
          %v2114 = vadd.f32 %v1776, %v2113
          %v2115 = vpop.f32.mrf.mxu0
          %2116 = vdwg.mxu0
          %2117 = vmatpush.bf16.msra.mxu0 %v2036
          %2118 = vmatpush.bf16.msra.mxu0 %v2032
          %2119 = vmatpush.bf16.msra.mxu0 %v2028
          %2120 = vmatpush.bf16.msra.mxu0 %v2024
          %2121 = vmatpush.bf16.msra.mxu0 %v2020
          %2122 = vmatpush.bf16.msra.mxu0 %v2016
          %2123 = vmatpush.bf16.msra.mxu0 %v2012
          %2124 = vmatpush.bf16.msra.mxu0 %v2008
          %2125 = vmatmul.bf16.gmra.mxu0 %v1710
          %v2126 = vpop.f32.mrf.mxu0
          %v2127 = vadd.f32 %v2114, %v2126
          %v2128 = vpop.f32.mrf.mxu0
          %2129 = vdwg.mxu0
          %2130 = vmatpush.bf16.msra.mxu0 %v2005
          %2131 = vmatpush.bf16.msra.mxu0 %v2001
          %2132 = vmatpush.bf16.msra.mxu0 %v1997
          %2133 = vmatpush.bf16.msra.mxu0 %v1993
          %2134 = vmatpush.bf16.msra.mxu0 %v1989
          %2135 = vmatpush.bf16.msra.mxu0 %v1985
          %2136 = vmatpush.bf16.msra.mxu0 %v1981
          %2137 = vmatpush.bf16.msra.mxu0 %v1977
          %2138 = vmatmul.bf16.gmra.mxu0 %v1709
          %v2139 = vpop.f32.mrf.mxu0
          %v2140 = vadd.f32 %v1777, %v2139
          %v2141 = vpop.f32.mrf.mxu0
          %2142 = vdwg.mxu0
          %2143 = vmatpush.bf16.msra.mxu0 %v2037
          %2144 = vmatpush.bf16.msra.mxu0 %v2033
          %2145 = vmatpush.bf16.msra.mxu0 %v2029
          %2146 = vmatpush.bf16.msra.mxu0 %v2025
          %2147 = vmatpush.bf16.msra.mxu0 %v2021
          %2148 = vmatpush.bf16.msra.mxu0 %v2017
          %2149 = vmatpush.bf16.msra.mxu0 %v2013
          %2150 = vmatpush.bf16.msra.mxu0 %v2009
          %2151 = vmatmul.bf16.gmra.mxu0 %v1710
          %v2152 = vpop.f32.mrf.mxu0
          %v2153 = vadd.f32 %v2140, %v2152
          %v2154 = vpop.f32.mrf.mxu0
          %2155 = vdwg.mxu0
          %2156 = vmatpush.bf16.msra.mxu0 %v2006
          %2157 = vmatpush.bf16.msra.mxu0 %v2002
          %2158 = vmatpush.bf16.msra.mxu0 %v1998
          %2159 = vmatpush.bf16.msra.mxu0 %v1994
          %2160 = vmatpush.bf16.msra.mxu0 %v1990
          %2161 = vmatpush.bf16.msra.mxu0 %v1986
          %2162 = vmatpush.bf16.msra.mxu0 %v1982
          %2163 = vmatpush.bf16.msra.mxu0 %v1978
          %2164 = vmatmul.bf16.gmra.mxu0 %v1709
          %v2165 = vpop.f32.mrf.mxu0
          %v2166 = vadd.f32 %v1778, %v2165
          %v2167 = vpop.f32.mrf.mxu0
          %2168 = vdwg.mxu0
          %2169 = vmatpush.bf16.msra.mxu0 %v2038
          %2170 = vmatpush.bf16.msra.mxu0 %v2034
          %2171 = vmatpush.bf16.msra.mxu0 %v2030
          %2172 = vmatpush.bf16.msra.mxu0 %v2026
          %2173 = vmatpush.bf16.msra.mxu0 %v2022
          %2174 = vmatpush.bf16.msra.mxu0 %v2018
          %2175 = vmatpush.bf16.msra.mxu0 %v2014
          %2176 = vmatpush.bf16.msra.mxu0 %v2010
          %2177 = vmatmul.bf16.gmra.mxu0 %v1710
          %v2178 = vpop.f32.mrf.mxu0
          %v2179 = vadd.f32 %v2166, %v2178
          %v2180 = vpop.f32.mrf.mxu0
          %2181 = vdwg.mxu0
          %2182 = vmatpush.bf16.msra.mxu0 %v2007
          %2183 = vmatpush.bf16.msra.mxu0 %v2003
          %2184 = vmatpush.bf16.msra.mxu0 %v1999
          %2185 = vmatpush.bf16.msra.mxu0 %v1995
          %2186 = vmatpush.bf16.msra.mxu0 %v1991
          %2187 = vmatpush.bf16.msra.mxu0 %v1987
          %2188 = vmatpush.bf16.msra.mxu0 %v1983
          %2189 = vmatpush.bf16.msra.mxu0 %v1979
          %2190 = vmatmul.bf16.gmra.mxu0 %v1709
          %v2191 = vpop.f32.mrf.mxu0
          %v2192 = vadd.f32 %v1779, %v2191
          %v2193 = vpop.f32.mrf.mxu0
          %2194 = vdwg.mxu0
          %2195 = vmatpush.bf16.msra.mxu0 %v2039
          %2196 = vmatpush.bf16.msra.mxu0 %v2035
          %2197 = vmatpush.bf16.msra.mxu0 %v2031
          %2198 = vmatpush.bf16.msra.mxu0 %v2027
          %2199 = vmatpush.bf16.msra.mxu0 %v2023
          %2200 = vmatpush.bf16.msra.mxu0 %v2019
          %2201 = vmatpush.bf16.msra.mxu0 %v2015
          %2202 = vmatpush.bf16.msra.mxu0 %v2011
          %2203 = vmatmul.bf16.gmra.mxu0 %v1710
          %v2204 = vpop.f32.mrf.mxu0
          %v2205 = vadd.f32 %v2192, %v2204
          %v2206 = vpop.f32.mrf.mxu0
          %2207 = vdwg.mxu0
          %v2208 = vmul.f32 %v2127, 0.5
          %v2209 = vmul.f32 %v2153, 0.5
          %v2210 = vmul.f32 %v2179, 0.5
          %v2211 = vmul.f32 %v2205, 0.5
          %v2212 = vmul.f32 %v2127, 0.044715
          %v2213 = vmul.f32 %v2153, 0.044715
          %v2214 = vmul.f32 %v2179, 0.044715
          %v2215 = vmul.f32 %v2205, 0.044715
          %v2216 = vmul.f32 %v2212, %v2127
          %v2217 = vmul.f32 %v2213, %v2153
          %v2218 = vmul.f32 %v2214, %v2179
          %v2219 = vmul.f32 %v2215, %v2205
          %v2220 = vmul.f32 %v2216, %v2127
          %v2221 = vmul.f32 %v2217, %v2153
          %v2222 = vmul.f32 %v2218, %v2179
          %v2223 = vmul.f32 %v2219, %v2205
          %v2224 = vadd.f32 %v2127, %v2220
          %v2225 = vadd.f32 %v2153, %v2221
          %v2226 = vadd.f32 %v2179, %v2222
          %v2227 = vadd.f32 %v2205, %v2223
          %v2228 = vmul.f32 %v2224, 0.7978846
          %v2229 = vmul.f32 %v2225, 0.7978846
          %v2230 = vmul.f32 %v2226, 0.7978846
          %v2231 = vmul.f32 %v2227, 0.7978846
          %v2232 = vtanh.pop %v2228
          %v2233 = vtanh.pop %v2229
          %v2234 = vtanh.pop %v2230
          %v2235 = vtanh.pop %v2231
          %v2236 = vadd.f32 %v2232, 1.0
          %v2237 = vadd.f32 %v2233, 1.0
          %v2238 = vadd.f32 %v2234, 1.0
          %v2239 = vadd.f32 %v2235, 1.0
          %v2240 = vmul.f32 %v2208, %v2236
          %v2241 = vmul.f32 %v2209, %v2237
          %v2242 = vmul.f32 %v2210, %v2238
          %v2243 = vmul.f32 %v2211, %v2239
          %v2244 = vpack.c.bf16 %v2240, %v2240
          %v2245 = vpack.c.bf16 %v2241, %v2241
          %v2246 = vpack.c.bf16 %v2242, %v2242
          %v2247 = vpack.c.bf16 %v2243, %v2243
          %v2248 = vld [vmem:[%s451] sm:$0xff]
          %v2249 = vld [vmem:[%s451 + $0x8] sm:$0xff]
          %v2250 = vld [vmem:[%s451 + $0x10] sm:$0xff]
          %v2251 = vld [vmem:[%s451 + $0x18] sm:$0xff]
          %v2252 = vld [vmem:[%s451 + $0x20] sm:$0xff]
          %v2253 = vld [vmem:[%s451 + $0x28] sm:$0xff]
          %v2254 = vld [vmem:[%s451 + $0x30] sm:$0xff]
          %v2255 = vld [vmem:[%s451 + $0x38] sm:$0xff]
          %v2256 = vld [vmem:[%s451 + $0x40] sm:$0xff]
          %v2257 = vld [vmem:[%s451 + $0x48] sm:$0xff]
          %v2258 = vld [vmem:[%s451 + $0x50] sm:$0xff]
          %v2259 = vld [vmem:[%s451 + $0x58] sm:$0xff]
          %v2260 = vld [vmem:[%s451 + $0x60] sm:$0xff]
          %v2261 = vld [vmem:[%s451 + $0x68] sm:$0xff]
          %v2262 = vld [vmem:[%s451 + $0x70] sm:$0xff]
          %v2263 = vld [vmem:[%s451 + $0x78] sm:$0xff]
          %v2264 = vld [vmem:[%s451 + $0x80] sm:$0xff]
          %v2265 = vld [vmem:[%s451 + $0x88] sm:$0xff]
          %v2266 = vld [vmem:[%s451 + $0x90] sm:$0xff]
          %v2267 = vld [vmem:[%s451 + $0x98] sm:$0xff]
          %v2268 = vld [vmem:[%s451 + $0xa0] sm:$0xff]
          %v2269 = vld [vmem:[%s451 + $0xa8] sm:$0xff]
          %v2270 = vld [vmem:[%s451 + $0xb0] sm:$0xff]
          %v2271 = vld [vmem:[%s451 + $0xb8] sm:$0xff]
          %v2272 = vld [vmem:[%s451 + $0xc0] sm:$0xff]
          %v2273 = vld [vmem:[%s451 + $0xc8] sm:$0xff]
          %v2274 = vld [vmem:[%s451 + $0xd0] sm:$0xff]
          %v2275 = vld [vmem:[%s451 + $0xd8] sm:$0xff]
          %v2276 = vld [vmem:[%s451 + $0xe0] sm:$0xff]
          %v2277 = vld [vmem:[%s451 + $0xe8] sm:$0xff]
          %v2278 = vld [vmem:[%s451 + $0xf0] sm:$0xff]
          %v2279 = vld [vmem:[%s451 + $0xf8] sm:$0xff]
          %v2280 = vld [vmem:[%s451 + $0x100] sm:$0xff]
          %v2281 = vld [vmem:[%s451 + $0x108] sm:$0xff]
          %v2282 = vld [vmem:[%s451 + $0x110] sm:$0xff]
          %v2283 = vld [vmem:[%s451 + $0x118] sm:$0xff]
          %v2284 = vld [vmem:[%s451 + $0x120] sm:$0xff]
          %v2285 = vld [vmem:[%s451 + $0x128] sm:$0xff]
          %v2286 = vld [vmem:[%s451 + $0x130] sm:$0xff]
          %v2287 = vld [vmem:[%s451 + $0x138] sm:$0xff]
          %v2288 = vld [vmem:[%s451 + $0x140] sm:$0xff]
          %v2289 = vld [vmem:[%s451 + $0x148] sm:$0xff]
          %v2290 = vld [vmem:[%s451 + $0x150] sm:$0xff]
          %v2291 = vld [vmem:[%s451 + $0x158] sm:$0xff]
          %v2292 = vld [vmem:[%s451 + $0x160] sm:$0xff]
          %v2293 = vld [vmem:[%s451 + $0x168] sm:$0xff]
          %v2294 = vld [vmem:[%s451 + $0x170] sm:$0xff]
          %v2295 = vld [vmem:[%s451 + $0x178] sm:$0xff]
          %v2296 = vld [vmem:[%s451 + $0x180] sm:$0xff]
          %v2297 = vld [vmem:[%s451 + $0x188] sm:$0xff]
          %v2298 = vld [vmem:[%s451 + $0x190] sm:$0xff]
          %v2299 = vld [vmem:[%s451 + $0x198] sm:$0xff]
          %v2300 = vld [vmem:[%s451 + $0x1a0] sm:$0xff]
          %v2301 = vld [vmem:[%s451 + $0x1a8] sm:$0xff]
          %v2302 = vld [vmem:[%s451 + $0x1b0] sm:$0xff]
          %v2303 = vld [vmem:[%s451 + $0x1b8] sm:$0xff]
          %v2304 = vld [vmem:[%s451 + $0x1c0] sm:$0xff]
          %v2305 = vld [vmem:[%s451 + $0x1c8] sm:$0xff]
          %v2306 = vld [vmem:[%s451 + $0x1d0] sm:$0xff]
          %v2307 = vld [vmem:[%s451 + $0x1d8] sm:$0xff]
          %v2308 = vld [vmem:[%s451 + $0x1e0] sm:$0xff]
          %v2309 = vld [vmem:[%s451 + $0x1e8] sm:$0xff]
          %v2310 = vld [vmem:[%s451 + $0x1f0] sm:$0xff]
          %v2311 = vld [vmem:[%s451 + $0x1f8] sm:$0xff]
          %v2313 = vperm.slane %v1704, 0
          %v2314 = vperm.slane %v1704, 1
          %v2381 = vunpack.c.l.b16 %v2248
          %v2382 = vunpack.c.h.b16 %v2248
          %v2383 = vunpack.c.l.b16 %v2249
          %v2384 = vunpack.c.h.b16 %v2249
          %v2385 = vunpack.c.l.b16 %v2250
          %v2386 = vunpack.c.h.b16 %v2250
          %v2387 = vunpack.c.l.b16 %v2251
          %v2388 = vunpack.c.h.b16 %v2251
          %v2389 = vunpack.c.l.b16 %v2252
          %v2390 = vunpack.c.h.b16 %v2252
          %v2391 = vunpack.c.l.b16 %v2253
          %v2392 = vunpack.c.h.b16 %v2253
          %v2393 = vunpack.c.l.b16 %v2254
          %v2394 = vunpack.c.h.b16 %v2254
          %v2395 = vunpack.c.l.b16 %v2255
          %v2396 = vunpack.c.h.b16 %v2255
          %v2397 = vunpack.c.l.b16 %v2256
          %v2398 = vunpack.c.h.b16 %v2256
          %v2399 = vunpack.c.l.b16 %v2257
          %v2400 = vunpack.c.h.b16 %v2257
          %v2401 = vunpack.c.l.b16 %v2258
          %v2402 = vunpack.c.h.b16 %v2258
          %v2403 = vunpack.c.l.b16 %v2259
          %v2404 = vunpack.c.h.b16 %v2259
          %v2405 = vunpack.c.l.b16 %v2260
          %v2406 = vunpack.c.h.b16 %v2260
          %v2407 = vunpack.c.l.b16 %v2261
          %v2408 = vunpack.c.h.b16 %v2261
          %v2409 = vunpack.c.l.b16 %v2262
          %v2410 = vunpack.c.h.b16 %v2262
          %v2411 = vunpack.c.l.b16 %v2263
          %v2412 = vunpack.c.h.b16 %v2263
          %v2413 = vunpack.c.l.b16 %v2264
          %v2414 = vunpack.c.h.b16 %v2264
          %v2415 = vunpack.c.l.b16 %v2265
          %v2416 = vunpack.c.h.b16 %v2265
          %v2417 = vunpack.c.l.b16 %v2266
          %v2418 = vunpack.c.h.b16 %v2266
          %v2419 = vunpack.c.l.b16 %v2267
          %v2420 = vunpack.c.h.b16 %v2267
          %v2421 = vunpack.c.l.b16 %v2268
          %v2422 = vunpack.c.h.b16 %v2268
          %v2423 = vunpack.c.l.b16 %v2269
          %v2424 = vunpack.c.h.b16 %v2269
          %v2425 = vunpack.c.l.b16 %v2270
          %v2426 = vunpack.c.h.b16 %v2270
          %v2427 = vunpack.c.l.b16 %v2271
          %v2428 = vunpack.c.h.b16 %v2271
          %v2429 = vunpack.c.l.b16 %v2272
          %v2430 = vunpack.c.h.b16 %v2272
          %v2431 = vunpack.c.l.b16 %v2273
          %v2432 = vunpack.c.h.b16 %v2273
          %v2433 = vunpack.c.l.b16 %v2274
          %v2434 = vunpack.c.h.b16 %v2274
          %v2435 = vunpack.c.l.b16 %v2275
          %v2436 = vunpack.c.h.b16 %v2275
          %v2437 = vunpack.c.l.b16 %v2276
          %v2438 = vunpack.c.h.b16 %v2276
          %v2439 = vunpack.c.l.b16 %v2277
          %v2440 = vunpack.c.h.b16 %v2277
          %v2441 = vunpack.c.l.b16 %v2278
          %v2442 = vunpack.c.h.b16 %v2278
          %v2443 = vunpack.c.l.b16 %v2279
          %v2444 = vunpack.c.h.b16 %v2279
          %v2445 = vunpack.c.l.b16 %v2280
          %v2446 = vunpack.c.h.b16 %v2280
          %v2447 = vunpack.c.l.b16 %v2281
          %v2448 = vunpack.c.h.b16 %v2281
          %v2449 = vunpack.c.l.b16 %v2282
          %v2450 = vunpack.c.h.b16 %v2282
          %v2451 = vunpack.c.l.b16 %v2283
          %v2452 = vunpack.c.h.b16 %v2283
          %v2453 = vunpack.c.l.b16 %v2284
          %v2454 = vunpack.c.h.b16 %v2284
          %v2455 = vunpack.c.l.b16 %v2285
          %v2456 = vunpack.c.h.b16 %v2285
          %v2457 = vunpack.c.l.b16 %v2286
          %v2458 = vunpack.c.h.b16 %v2286
          %v2459 = vunpack.c.l.b16 %v2287
          %v2460 = vunpack.c.h.b16 %v2287
          %v2461 = vunpack.c.l.b16 %v2288
          %v2462 = vunpack.c.h.b16 %v2288
          %v2463 = vunpack.c.l.b16 %v2289
          %v2464 = vunpack.c.h.b16 %v2289
          %v2465 = vunpack.c.l.b16 %v2290
          %v2466 = vunpack.c.h.b16 %v2290
          %v2467 = vunpack.c.l.b16 %v2291
          %v2468 = vunpack.c.h.b16 %v2291
          %v2469 = vunpack.c.l.b16 %v2292
          %v2470 = vunpack.c.h.b16 %v2292
          %v2471 = vunpack.c.l.b16 %v2293
          %v2472 = vunpack.c.h.b16 %v2293
          %v2473 = vunpack.c.l.b16 %v2294
          %v2474 = vunpack.c.h.b16 %v2294
          %v2475 = vunpack.c.l.b16 %v2295
          %v2476 = vunpack.c.h.b16 %v2295
          %v2477 = vunpack.c.l.b16 %v2296
          %v2478 = vunpack.c.h.b16 %v2296
          %v2479 = vunpack.c.l.b16 %v2297
          %v2480 = vunpack.c.h.b16 %v2297
          %v2481 = vunpack.c.l.b16 %v2298
          %v2482 = vunpack.c.h.b16 %v2298
          %v2483 = vunpack.c.l.b16 %v2299
          %v2484 = vunpack.c.h.b16 %v2299
          %v2485 = vunpack.c.l.b16 %v2300
          %v2486 = vunpack.c.h.b16 %v2300
          %v2487 = vunpack.c.l.b16 %v2301
          %v2488 = vunpack.c.h.b16 %v2301
          %v2489 = vunpack.c.l.b16 %v2302
          %v2490 = vunpack.c.h.b16 %v2302
          %v2491 = vunpack.c.l.b16 %v2303
          %v2492 = vunpack.c.h.b16 %v2303
          %v2493 = vunpack.c.l.b16 %v2304
          %v2494 = vunpack.c.h.b16 %v2304
          %v2495 = vunpack.c.l.b16 %v2305
          %v2496 = vunpack.c.h.b16 %v2305
          %v2497 = vunpack.c.l.b16 %v2306
          %v2498 = vunpack.c.h.b16 %v2306
          %v2499 = vunpack.c.l.b16 %v2307
          %v2500 = vunpack.c.h.b16 %v2307
          %v2501 = vunpack.c.l.b16 %v2308
          %v2502 = vunpack.c.h.b16 %v2308
          %v2503 = vunpack.c.l.b16 %v2309
          %v2504 = vunpack.c.h.b16 %v2309
          %v2505 = vunpack.c.l.b16 %v2310
          %v2506 = vunpack.c.h.b16 %v2310
          %v2507 = vunpack.c.l.b16 %v2311
          %v2508 = vunpack.c.h.b16 %v2311
          %v2509 = vpack.c.b16 %v2383, %v2381
          %v2510 = vpack.c.b16 %v2384, %v2382
          %v2511 = vpack.c.b16 %v2387, %v2385
          %v2512 = vpack.c.b16 %v2388, %v2386
          %v2513 = vpack.c.b16 %v2391, %v2389
          %v2514 = vpack.c.b16 %v2392, %v2390
          %v2515 = vpack.c.b16 %v2395, %v2393
          %v2516 = vpack.c.b16 %v2396, %v2394
          %v2517 = vpack.c.b16 %v2399, %v2397
          %v2518 = vpack.c.b16 %v2400, %v2398
          %v2519 = vpack.c.b16 %v2403, %v2401
          %v2520 = vpack.c.b16 %v2404, %v2402
          %v2521 = vpack.c.b16 %v2407, %v2405
          %v2522 = vpack.c.b16 %v2408, %v2406
          %v2523 = vpack.c.b16 %v2411, %v2409
          %v2524 = vpack.c.b16 %v2412, %v2410
          %v2525 = vpack.c.b16 %v2415, %v2413
          %v2526 = vpack.c.b16 %v2416, %v2414
          %v2527 = vpack.c.b16 %v2419, %v2417
          %v2528 = vpack.c.b16 %v2420, %v2418
          %v2529 = vpack.c.b16 %v2423, %v2421
          %v2530 = vpack.c.b16 %v2424, %v2422
          %v2531 = vpack.c.b16 %v2427, %v2425
          %v2532 = vpack.c.b16 %v2428, %v2426
          %v2533 = vpack.c.b16 %v2431, %v2429
          %v2534 = vpack.c.b16 %v2432, %v2430
          %v2535 = vpack.c.b16 %v2435, %v2433
          %v2536 = vpack.c.b16 %v2436, %v2434
          %v2537 = vpack.c.b16 %v2439, %v2437
          %v2538 = vpack.c.b16 %v2440, %v2438
          %v2539 = vpack.c.b16 %v2443, %v2441
          %v2540 = vpack.c.b16 %v2444, %v2442
          %v2541 = vpack.c.b16 %v2447, %v2445
          %v2542 = vpack.c.b16 %v2448, %v2446
          %v2543 = vpack.c.b16 %v2451, %v2449
          %v2544 = vpack.c.b16 %v2452, %v2450
          %v2545 = vpack.c.b16 %v2455, %v2453
          %v2546 = vpack.c.b16 %v2456, %v2454
          %v2547 = vpack.c.b16 %v2459, %v2457
          %v2548 = vpack.c.b16 %v2460, %v2458
          %v2549 = vpack.c.b16 %v2463, %v2461
          %v2550 = vpack.c.b16 %v2464, %v2462
          %v2551 = vpack.c.b16 %v2467, %v2465
          %v2552 = vpack.c.b16 %v2468, %v2466
          %v2553 = vpack.c.b16 %v2471, %v2469
          %v2554 = vpack.c.b16 %v2472, %v2470
          %v2555 = vpack.c.b16 %v2475, %v2473
          %v2556 = vpack.c.b16 %v2476, %v2474
          %v2557 = vpack.c.b16 %v2479, %v2477
          %v2558 = vpack.c.b16 %v2480, %v2478
          %v2559 = vpack.c.b16 %v2483, %v2481
          %v2560 = vpack.c.b16 %v2484, %v2482
          %v2561 = vpack.c.b16 %v2487, %v2485
          %v2562 = vpack.c.b16 %v2488, %v2486
          %v2563 = vpack.c.b16 %v2491, %v2489
          %v2564 = vpack.c.b16 %v2492, %v2490
          %v2565 = vpack.c.b16 %v2495, %v2493
          %v2566 = vpack.c.b16 %v2496, %v2494
          %v2567 = vpack.c.b16 %v2499, %v2497
          %v2568 = vpack.c.b16 %v2500, %v2498
          %v2569 = vpack.c.b16 %v2503, %v2501
          %v2570 = vpack.c.b16 %v2504, %v2502
          %v2571 = vpack.c.b16 %v2507, %v2505
          %v2572 = vpack.c.b16 %v2508, %v2506
          %2637 = vmatpush.bf16.msra.mxu0 %v2523
          %2638 = vmatpush.bf16.msra.mxu0 %v2521
          %2639 = vmatpush.bf16.msra.mxu0 %v2519
          %2640 = vmatpush.bf16.msra.mxu0 %v2517
          %2641 = vmatpush.bf16.msra.mxu0 %v2515
          %2642 = vmatpush.bf16.msra.mxu0 %v2513
          %2643 = vmatpush.bf16.msra.mxu0 %v2511
          %2644 = vmatpush.bf16.msra.mxu0 %v2509
          %2645 = vmatmul.bf16.gmra.mxu0 %v2244
          %v2646 = vpop.f32.mrf.mxu0
          %v2647 = vadd.f32 %v2313, %v2646
          %v2648 = vpop.f32.mrf.mxu0
          %2649 = vdwg.mxu0
          %2650 = vmatpush.bf16.msra.mxu0 %v2539
          %2651 = vmatpush.bf16.msra.mxu0 %v2537
          %2652 = vmatpush.bf16.msra.mxu0 %v2535
          %2653 = vmatpush.bf16.msra.mxu0 %v2533
          %2654 = vmatpush.bf16.msra.mxu0 %v2531
          %2655 = vmatpush.bf16.msra.mxu0 %v2529
          %2656 = vmatpush.bf16.msra.mxu0 %v2527
          %2657 = vmatpush.bf16.msra.mxu0 %v2525
          %2658 = vmatmul.bf16.gmra.mxu0 %v2245
          %v2659 = vpop.f32.mrf.mxu0
          %v2660 = vadd.f32 %v2647, %v2659
          %v2661 = vpop.f32.mrf.mxu0
          %2662 = vdwg.mxu0
          %2663 = vmatpush.bf16.msra.mxu0 %v2555
          %2664 = vmatpush.bf16.msra.mxu0 %v2553
          %2665 = vmatpush.bf16.msra.mxu0 %v2551
          %2666 = vmatpush.bf16.msra.mxu0 %v2549
          %2667 = vmatpush.bf16.msra.mxu0 %v2547
          %2668 = vmatpush.bf16.msra.mxu0 %v2545
          %2669 = vmatpush.bf16.msra.mxu0 %v2543
          %2670 = vmatpush.bf16.msra.mxu0 %v2541
          %2671 = vmatmul.bf16.gmra.mxu0 %v2246
          %v2672 = vpop.f32.mrf.mxu0
          %v2673 = vadd.f32 %v2660, %v2672
          %v2674 = vpop.f32.mrf.mxu0
          %2675 = vdwg.mxu0
          %2676 = vmatpush.bf16.msra.mxu0 %v2571
          %2677 = vmatpush.bf16.msra.mxu0 %v2569
          %2678 = vmatpush.bf16.msra.mxu0 %v2567
          %2679 = vmatpush.bf16.msra.mxu0 %v2565
          %2680 = vmatpush.bf16.msra.mxu0 %v2563
          %2681 = vmatpush.bf16.msra.mxu0 %v2561
          %2682 = vmatpush.bf16.msra.mxu0 %v2559
          %2683 = vmatpush.bf16.msra.mxu0 %v2557
          %2684 = vmatmul.bf16.gmra.mxu0 %v2247
          %v2685 = vpop.f32.mrf.mxu0
          %v2686 = vadd.f32 %v2673, %v2685
          %v2687 = vpop.f32.mrf.mxu0
          %2688 = vdwg.mxu0
          %2689 = vmatpush.bf16.msra.mxu0 %v2524
          %2690 = vmatpush.bf16.msra.mxu0 %v2522
          %2691 = vmatpush.bf16.msra.mxu0 %v2520
          %2692 = vmatpush.bf16.msra.mxu0 %v2518
          %2693 = vmatpush.bf16.msra.mxu0 %v2516
          %2694 = vmatpush.bf16.msra.mxu0 %v2514
          %2695 = vmatpush.bf16.msra.mxu0 %v2512
          %2696 = vmatpush.bf16.msra.mxu0 %v2510
          %2697 = vmatmul.bf16.gmra.mxu0 %v2244
          %v2698 = vpop.f32.mrf.mxu0
          %v2699 = vadd.f32 %v2314, %v2698
          %v2700 = vpop.f32.mrf.mxu0
          %2701 = vdwg.mxu0
          %2702 = vmatpush.bf16.msra.mxu0 %v2540
          %2703 = vmatpush.bf16.msra.mxu0 %v2538
          %2704 = vmatpush.bf16.msra.mxu0 %v2536
          %2705 = vmatpush.bf16.msra.mxu0 %v2534
          %2706 = vmatpush.bf16.msra.mxu0 %v2532
          %2707 = vmatpush.bf16.msra.mxu0 %v2530
          %2708 = vmatpush.bf16.msra.mxu0 %v2528
          %2709 = vmatpush.bf16.msra.mxu0 %v2526
          %2710 = vmatmul.bf16.gmra.mxu0 %v2245
          %v2711 = vpop.f32.mrf.mxu0
          %v2712 = vadd.f32 %v2699, %v2711
          %v2713 = vpop.f32.mrf.mxu0
          %2714 = vdwg.mxu0
          %2715 = vmatpush.bf16.msra.mxu0 %v2556
          %2716 = vmatpush.bf16.msra.mxu0 %v2554
          %2717 = vmatpush.bf16.msra.mxu0 %v2552
          %2718 = vmatpush.bf16.msra.mxu0 %v2550
          %2719 = vmatpush.bf16.msra.mxu0 %v2548
          %2720 = vmatpush.bf16.msra.mxu0 %v2546
          %2721 = vmatpush.bf16.msra.mxu0 %v2544
          %2722 = vmatpush.bf16.msra.mxu0 %v2542
          %2723 = vmatmul.bf16.gmra.mxu0 %v2246
          %v2724 = vpop.f32.mrf.mxu0
          %v2725 = vadd.f32 %v2712, %v2724
          %v2726 = vpop.f32.mrf.mxu0
          %2727 = vdwg.mxu0
          %2728 = vmatpush.bf16.msra.mxu0 %v2572
          %2729 = vmatpush.bf16.msra.mxu0 %v2570
          %2730 = vmatpush.bf16.msra.mxu0 %v2568
          %2731 = vmatpush.bf16.msra.mxu0 %v2566
          %2732 = vmatpush.bf16.msra.mxu0 %v2564
          %2733 = vmatpush.bf16.msra.mxu0 %v2562
          %2734 = vmatpush.bf16.msra.mxu0 %v2560
          %2735 = vmatpush.bf16.msra.mxu0 %v2558
          %2736 = vmatmul.bf16.gmra.mxu0 %v2247
          %v2737 = vpop.f32.mrf.mxu0
          %v2738 = vadd.f32 %v2725, %v2737
          %v2739 = vpop.f32.mrf.mxu0
          %2740 = vdwg.mxu0
          %v2741 = vadd.f32 %v1695, %v2686
          %v2742 = vadd.f32 %v1696, %v2738
          %v2743 = vadd.f32 %v2741, %v2742
          %2744 = vadd.xlane.f32.xlu0 %v2743
          %v2745 = vpop.xlane.xlu0 %2744
          %v2746 = vmul.f32 %v2745, %v1660
          %v2747 = vsub.f32 %v2741, %v2746
          %v2748 = vsub.f32 %v2742, %v2746
          %v2749 = vmul.f32 %v2747, %v2747
          %v2750 = vmul.f32 %v2748, %v2748
          %v2751 = vadd.f32 %v2749, %v2750
          %2752 = vadd.xlane.f32.xlu0 %v2751
          %v2753 = vpop.xlane.xlu0 %2752
          %v2754 = vmul.f32 %v2753, %v1660
          %v2755 = vadd.f32 %v2754, 1e-05
          %v2756 = vrsqrt.pop %v2755
          %v2757 = vmul.f32 %v2756, %v2755
          %v2758 = vmul.f32 %v2757, %v2756
          %v2759 = vmul.f32 0.5, %v2758
          %v2760 = vsub.f32 1.5, %v2759
          %v2761 = vmul.f32 %v2756, %v2760
          %vm2762 = vweird.f32 %v2755
          %vm2763 = vweird.f32 %v2756
          %vm2764 = vmor %vm2762, %vm2763
          %v2765 = vsel %vm2764, %v2756, %v2761
          %v2766 = vmul.f32 %v2747, %v2765
          %v2767 = vmul.f32 %v2748, %v2765
          %v2769 = vperm.slane %v1706, 0
          %v2770 = vperm.slane %v1706, 1
          %v2773 = vmul.f32 %v2766, %v2769
          %v2774 = vmul.f32 %v2767, %v2770
          %v2776 = vperm.slane %v1708, 0
          %v2777 = vperm.slane %v1708, 1
          %v2780 = vadd.f32 %v2773, %v2776
          %v2781 = vadd.f32 %v2774, %v2777
          %2782 = vst [vmem:[%s512] sm:$0xff] %v2780
          %2783 = vst [vmem:[%s512 + $0x8] sm:$0xff] %v2781
        $region76: #{transformer_encoder_forward.1} parent=47 // pred_fallthru
          _
        %p2784 = scmp.eq.s32.totalorder %s35, 2
        // Predicated region
        $region77: #{transformer_encoder_forward.1} parent=47 // pred_check
          %p2785 = pneg %p2784
        $region78: #{transformer_encoder_forward.1} parent=47 // pred_check_branch
          %2787 = sbr.rel (%p2785) target = $region80
        $region79: #{transformer_encoder_forward.1} parent=47 // pred_region
          %2788 = vst [vmem:[%s512] sm:$0xff] %v1695
          %2789 = vst [vmem:[%s512 + $0x8] sm:$0xff] %v1696
        $region80: #{transformer_encoder_forward.1} parent=47 // pred_fallthru
          _
        %s2790 = sand.u32 %s240, 1
        %s2791 = scalar_lea.sflag [#allocation4], %s2790
        %s2792 = sand.u32 %s240, 1
        %s2793 = smul.addr %s2792, 16
        %s2794 = scalar_lea.vmem [#allocation11], %s2793
        // Predicated region
        $region81: #{transformer_encoder_forward.1} parent=47 // pred_check
          %p2795 = pneg %p250
        $region82: #{transformer_encoder_forward.1} parent=47 // pred_check_branch
          %2797 = sbr.rel (%p2795) target = $region84
        $region83: #{transformer_encoder_forward.1} parent=47 // pred_region
          %2799 = vsyncadd %s2791, 0
          %s2800 = smul.addr %s34, 2
          %s2801 = smul.addr %s2800, 8
          %s2802 = scalar_lea.hbm %s7, %s2801
          %s2804 = sshll.u32 %s2794, 4
          %s2805 = int_to_ptr.vmem [resolvable:$true] %s2804
          %s2806 = sshll.u32 %s2802, 4
          %s2807 = int_to_ptr.hbm [resolvable:$true] %s2806
          %2809 = dma.vmem_to_hbm [thread:$0]  %s2805, 256, %s2807, %s2791
        $region84: #{transformer_encoder_forward.1} parent=47 // pred_fallthru
          _
      $region48: #{transformer_encoder_forward.1} parent=5 // pred_fallthru
        _
      %p2810 = scmp.le.s32.totalorder 2, %s25
      // Predicated region
      $region85: #{transformer_encoder_forward.1} parent=5 // pred_check
        %p2811 = pneg %p2810
      $region86: #{transformer_encoder_forward.1} parent=5 // pred_check_branch
        %2813 = sbr.rel (%p2811) target = $region88
      $region87: #{transformer_encoder_forward.1} parent=5 // pred_region
        %s2814 = ssub.s32 %s25, 2
        // Predicated region
        $region89: #{transformer_encoder_forward.1} parent=87 // pred_check
          %p2815 = pneg %p256
        $region90: #{transformer_encoder_forward.1} parent=87 // pred_check_branch
          %2817 = sbr.rel (%p2815) target = $region92
        $region91: #{transformer_encoder_forward.1} parent=87 // pred_region
          %s2818 = sand.u32 %s241, 1
          %s2819 = scalar_lea.sflag [#allocation4], %s2818
          %s2820 = sand.u32 %s241, 1
          %s2821 = smul.addr %s2820, 16
          %s2822 = scalar_lea.vmem [#allocation11], %s2821
          %2824 = dma.done %s2819, 256
        $region92: #{transformer_encoder_forward.1} parent=87 // pred_fallthru
          _
      $region88: #{transformer_encoder_forward.1} parent=5 // pred_fallthru
        _
    $region6: #{transformer_encoder_forward.1} parent=1 // loop_footer
      %s29 = sadd.s32 1, %s25
    $region7: #{transformer_encoder_forward.1} parent=1 // loop_footer_branch
      %24 = sbr.rel target = $region3
    $region8: #{transformer_encoder_forward.1} parent=1 // loop_exit
      _
    %2825 = vsyncpa [#allocation3], 1
    %s2826 = scalar_lea.sflag [#allocation3], 1
    %2827 = vsyncpa %s2826, 1
    %2828 = vsyncpa [#allocation6], 1
    %s2829 = scalar_lea.sflag [#allocation6], 1
    %2830 = vsyncpa %s2829, 1
    %2831 = vsyncpa [#allocation9], 1
    %s2832 = scalar_lea.sflag [#allocation9], 1
    %2833 = vsyncpa %s2832, 1
    %2834 = vsyncpa [#allocation4], 1
    %s2835 = scalar_lea.sflag [#allocation4], 1
    %2836 = vsyncpa %s2835, 1

</llo_original>
